<compile_context>
chip_gen: v6e
topology: v6e:2x2x1
jax: 0.10.0
libtpu: 0.0.40
codegen_flags: <defaults>
</compile_context>

<pallas_src>
import functools

import jax
import jax.numpy as jnp
from jax import lax
from jax.experimental import pallas as pl
from jax.experimental.pallas import tpu as pltpu


def _log_sigmoid(x):
    # numerically stable log(sigmoid(x)) = min(x, 0) - log1p(exp(-|x|))
    return jnp.minimum(x, 0.0) - jnp.log1p(jnp.exp(-jnp.abs(x)))


def _skipgram_kernel(pos_u_ref, v_idx_ref,        # scalar-prefetch indices (SMEM)
                     u_tab_ref, v_tab_ref,        # full embedding tables (VMEM)
                     out_ref,                     # (1, 8, 128) per-tile partial
                     u_buf, v_buf,                # f32 gather scratch (VMEM)
                     *, bt, C):
    """One batch tile: in-VMEM gather + merged positive/negative NEG loss."""
    t = pl.program_id(0)
    row0 = t * bt

    # ---- gather: dynamic-slice rows out of the VMEM-resident tables --------
    def gather_row(i, carry):
        uidx = pos_u_ref[row0 + i]
        u_buf[pl.ds(i, 1), :] = u_tab_ref[pl.ds(uidx, 1), :].astype(jnp.float32)
        base = (row0 + i) * C
        for c in range(C):                        # static: C = N + 1 is small
            vidx = v_idx_ref[base + c]
            v_buf[pl.ds(i, 1), c, :] = (
                v_tab_ref[pl.ds(vidx, 1), :].astype(jnp.float32))
        return carry

    # Fully unroll for small tiles (LLO visibility); rolled loop for large bt.
    lax.fori_loop(0, bt, gather_row, 0, unroll=(bt <= 32))

    # ---- compute (VPU + XLU; no MXU) ---------------------------------------
    u = u_buf[...]                                # (bt, D)  f32
    v = v_buf[...]                                # (bt, C, D) f32, col 0 = positive

    s = jnp.sum(v * u[:, None, :], axis=-1)       # (bt, C) scores
    s = jnp.clip(s, -10.0, 10.0)

    col = lax.broadcasted_iota(jnp.int32, s.shape, 1)
    signed = jnp.where(col == 0, s, -s)           # +score (positive), -score (negatives)
    tile_loss = -jnp.sum(_log_sigmoid(signed))    # scalar partial sum for this tile

    # Lane-dense per-tile output slab (each tile owns its block -> parallel-safe).
    out_ref[...] = jnp.full(out_ref.shape, tile_loss, dtype=jnp.float32)


@functools.partial(jax.jit, static_argnames=("batch_tile",))
def skipgram_forward(u_weight, v_weight, pos_u, pos_v, neg_v, *, batch_tile=256):
    """Fused SkipGram forward: embedding gathers + NEG loss in one Pallas kernel."""
    B = pos_u.shape[0]
    N = neg_v.shape[1]
    V, D = u_weight.shape
    C = N + 1                                      # column 0 = positive context

    # Largest tile <= batch_tile that divides B.
    bt = min(batch_tile, B)
    while B % bt != 0:
        bt -= 1
    num_tiles = B // bt

    pos_u_i = pos_u.astype(jnp.int32)
    # Merge positive + negative v-indices: (B, C) flattened to 1-D for SMEM.
    v_idx = jnp.concatenate(
        [pos_v.astype(jnp.int32)[:, None], neg_v.astype(jnp.int32)], axis=1
    ).reshape(-1)                                  # (B * C,)

    # ---- per-generation VMEM budget (64 MiB/TC on v7x, 128 MiB on v5e/v6e) --
    table_bytes = (u_weight.size * u_weight.dtype.itemsize
                   + v_weight.size * v_weight.dtype.itemsize)
    scratch_bytes = (bt * D + bt * C * D) * 4      # f32 gather buffers
    try:
        vmem_cap = int(pltpu.get_tpu_info().vmem_capacity_bytes)
    except Exception:
        vmem_cap = 64 * 1024 * 1024                # conservative v7x default
    budget = int(vmem_cap * 0.70)                  # leave headroom for Mosaic internals
    need = 2 * table_bytes + scratch_bytes + 2 * (8 * 128 * 4) + (1 << 20)
    if need > budget:
        # TODO(synk): fall back to an HBM DMA-gather kernel for huge vocab tables.
        raise ValueError(
            f"embedding tables need ~{need} B of VMEM but budget is {budget} B")
    vmem_limit_bytes = int(min(max(need, 16 << 20), budget))

    kernel = functools.partial(_skipgram_kernel, bt=bt, C=C)

    cost = pl.CostEstimate(
        flops=2 * B * C * D,
        transcendentals=4 * B * C,
        bytes_accessed=int(table_bytes + (B + B * C) * 4
                           + num_tiles * 8 * 128 * 4),
    )

    partials = pl.pallas_call(
        kernel,
        out_shape=jax.ShapeDtypeStruct((num_tiles, 8, 128), jnp.float32),
        grid_spec=pltpu.PrefetchScalarGridSpec(
            num_scalar_prefetch=2,
            grid=(num_tiles,),
            in_specs=[
                pl.BlockSpec((V, D), lambda t, pu, vi: (0, 0)),  # u table, VMEM-resident
                pl.BlockSpec((V, D), lambda t, pu, vi: (0, 0)),  # v table, VMEM-resident
            ],
            out_specs=pl.BlockSpec((1, 8, 128), lambda t, pu, vi: (t, 0, 0)),
            scratch_shapes=[
                pltpu.VMEM((bt, D), jnp.float32),       # gathered u rows (f32)
                pltpu.VMEM((bt, C, D), jnp.float32),    # gathered pos+neg v rows (f32)
            ],
        ),
        compiler_params=pltpu.CompilerParams(
            dimension_semantics=("parallel",),      # shards batch tiles across TCs (v7x)
            vmem_limit_bytes=vmem_limit_bytes,
        ),
        cost_estimate=cost,
    )(pos_u_i, v_idx, u_weight, v_weight)

    # Tiny epilogue: combine per-tile partial sums and take the batch mean.
    return jnp.sum(partials[:, 0, 0]) / jnp.float32(B)


def _reference_forward(u_weight, v_weight, pos_u, pos_v, neg_v):
    # Pure-JAX reference mirroring the PyTorch forward.
    emb_u = u_weight[pos_u]
    emb_v = v_weight[pos_v]
    emb_neg_v = v_weight[neg_v]
    score = jnp.sum(emb_u * emb_v, axis=1)
    score = jnp.clip(score, -10.0, 10.0)
    score = -_log_sigmoid(score)
    neg_score = jnp.einsum('bnd,bd->bn', emb_neg_v, emb_u)
    neg_score = jnp.clip(neg_score, -10.0, 10.0)
    neg_score = -jnp.sum(_log_sigmoid(-neg_score), axis=1)
    return jnp.mean(score + neg_score)


if __name__ == "__main__":
    emb_size = 50       # vocab
    emb_dim = 32        # embedding dimension
    B = 8               # batch
    N = 5               # negatives per positive

    key = jax.random.PRNGKey(0)
    k_u, k_v, k_pu, k_pv, k_nv = jax.random.split(key, 5)

    initrange = 1.0 / emb_dim
    # Module semantics: u ~ Uniform(-1/D, 1/D), v = 0.
    u_weight = jax.random.uniform(
        k_u, (emb_size, emb_dim), jnp.float32, -initrange, initrange)
    v_weight = jnp.zeros((emb_size, emb_dim), jnp.float32)

    pos_u = jax.random.randint(k_pu, (B,), 0, emb_size)
    pos_v = jax.random.randint(k_pv, (B,), 0, emb_size)
    neg_v = jax.random.randint(k_nv, (B, N), 0, emb_size)

    # Run with module-faithful init (v = 0).
    loss = jax.block_until_ready(
        skipgram_forward(u_weight, v_weight, pos_u, pos_v, neg_v))

    # Extra correctness check with a non-trivial v table (exercises the math).
    v_weight_rand = jax.random.uniform(
        k_v, (emb_size, emb_dim), jnp.float32, -initrange, initrange)
    loss_rand = jax.block_until_ready(
        skipgram_forward(u_weight, v_weight_rand, pos_u, pos_v, neg_v))

    ref_zero = _reference_forward(u_weight, v_weight, pos_u, pos_v, neg_v)
    ref_rand = _reference_forward(u_weight, v_weight_rand, pos_u, pos_v, neg_v)

    assert jnp.allclose(loss, ref_zero, atol=1e-5, rtol=1e-5), (loss, ref_zero)
    assert jnp.allclose(loss_rand, ref_rand, atol=1e-5, rtol=1e-5), (loss_rand, ref_rand)

    print("KERNEL_OK")
</pallas_src>

<mosaic_0001>
module attributes {stable_mosaic.version = 11 : i64} {
  func.func @_skipgram_kernel(%arg0: i32, %arg1: memref<8xi32, #tpu.memory_space<smem>>, %arg2: memref<48xi32, #tpu.memory_space<smem>>, %arg3: memref<50x32xf32, #tpu.memory_space<vmem>>, %arg4: memref<50x32xf32, #tpu.memory_space<vmem>>, %arg5: memref<1x8x128xf32, #tpu.memory_space<vmem>>, %arg6: memref<8x32xf32, #tpu.memory_space<vmem>>, %arg7: memref<8x6x32xf32, #tpu.memory_space<vmem>>) attributes {dimension_semantics = [#tpu.dimension_semantics<parallel>], iteration_bounds = array<i64: 1>, scalar_prefetch = 2 : i64, scratch_operands = 2 : i64, tpu.core_type = #tpu.core_type<tc>, window_params = [{pipeline_mode = #tpu.pipeline_mode<synchronous>, transform_indices = @transform_0, window_bounds = array<i64: 50, 32>}, {pipeline_mode = #tpu.pipeline_mode<synchronous>, transform_indices = @transform_1, window_bounds = array<i64: 50, 32>}, {transform_indices = @transform_2, window_bounds = array<i64: 1, 8, 128>}]} {
    %c8_i32 = arith.constant 8 : i32
    %0 = arith.muli %arg0, %c8_i32 : i32
    %c0_i32 = arith.constant 0 : i32
    %1 = arith.addi %0, %c0_i32 : i32
    %2 = arith.index_cast %1 : i32 to index
    %3 = memref.load %arg1[%2] : memref<8xi32, #tpu.memory_space<smem>>
    %4 = arith.index_cast %3 : i32 to index
    %c0 = arith.constant 0 : index
    %5 = vector.load %arg3[%4, %c0] : memref<50x32xf32, #tpu.memory_space<vmem>>, vector<1x32xf32>
    %6 = arith.index_cast %c0_i32 : i32 to index
    %c0_0 = arith.constant 0 : index
    %7 = vector.load %arg6[%6, %c0_0] : memref<8x32xf32, #tpu.memory_space<vmem>>, vector<1x32xf32>
    tpu.vector_store %arg6[%6, %c0_0], %5 {strides = array<i32>} : memref<8x32xf32, #tpu.memory_space<vmem>>, vector<1x32xf32>,
    %8 = arith.addi %0, %c0_i32 : i32
    %c6_i32 = arith.constant 6 : i32
    %9 = arith.muli %8, %c6_i32 : i32
    %c0_i32_1 = arith.constant 0 : i32
    %10 = arith.addi %9, %c0_i32_1 : i32
    %11 = arith.index_cast %10 : i32 to index
    %12 = memref.load %arg2[%11] : memref<48xi32, #tpu.memory_space<smem>>
    %13 = arith.index_cast %12 : i32 to index
    %c0_2 = arith.constant 0 : index
    %14 = vector.load %arg4[%13, %c0_2] : memref<50x32xf32, #tpu.memory_space<vmem>>, vector<1x32xf32>
    %15 = arith.index_cast %c0_i32 : i32 to index
    %c0_3 = arith.constant 0 : index
    %c0_4 = arith.constant 0 : index
    %16 = vector.load %arg7[%15, %c0_3, %c0_4] : memref<8x6x32xf32, #tpu.memory_space<vmem>>, vector<1x1x32xf32>
    %17 = vector.shape_cast %16 : vector<1x1x32xf32> to vector<1x32xf32>
    %18 = vector.shape_cast %14 : vector<1x32xf32> to vector<1x1x32xf32>
    tpu.vector_store %arg7[%15, %c0_3, %c0_4], %18 {strides = array<i32>} : memref<8x6x32xf32, #tpu.memory_space<vmem>>, vector<1x1x32xf32>,
    %c1_i32 = arith.constant 1 : i32
    %19 = arith.addi %9, %c1_i32 : i32
    %20 = arith.index_cast %19 : i32 to index
    %21 = memref.load %arg2[%20] : memref<48xi32, #tpu.memory_space<smem>>
    %22 = arith.index_cast %21 : i32 to index
    %c0_5 = arith.constant 0 : index
    %23 = vector.load %arg4[%22, %c0_5] : memref<50x32xf32, #tpu.memory_space<vmem>>, vector<1x32xf32>
    %24 = arith.index_cast %c0_i32 : i32 to index
    %c1 = arith.constant 1 : index
    %c0_6 = arith.constant 0 : index
    %25 = vector.load %arg7[%24, %c1, %c0_6] : memref<8x6x32xf32, #tpu.memory_space<vmem>>, vector<1x1x32xf32>
    %26 = vector.shape_cast %25 : vector<1x1x32xf32> to vector<1x32xf32>
    %27 = vector.shape_cast %23 : vector<1x32xf32> to vector<1x1x32xf32>
    tpu.vector_store %arg7[%24, %c1, %c0_6], %27 {strides = array<i32>} : memref<8x6x32xf32, #tpu.memory_space<vmem>>, vector<1x1x32xf32>,
    %c2_i32 = arith.constant 2 : i32
    %28 = arith.addi %9, %c2_i32 : i32
    %29 = arith.index_cast %28 : i32 to index
    %30 = memref.load %arg2[%29] : memref<48xi32, #tpu.memory_space<smem>>
    %31 = arith.index_cast %30 : i32 to index
    %c0_7 = arith.constant 0 : index
    %32 = vector.load %arg4[%31, %c0_7] : memref<50x32xf32, #tpu.memory_space<vmem>>, vector<1x32xf32>
    %33 = arith.index_cast %c0_i32 : i32 to index
    %c2 = arith.constant 2 : index
    %c0_8 = arith.constant 0 : index
    %34 = vector.load %arg7[%33, %c2, %c0_8] : memref<8x6x32xf32, #tpu.memory_space<vmem>>, vector<1x1x32xf32>
    %35 = vector.shape_cast %34 : vector<1x1x32xf32> to vector<1x32xf32>
    %36 = vector.shape_cast %32 : vector<1x32xf32> to vector<1x1x32xf32>
    tpu.vector_store %arg7[%33, %c2, %c0_8], %36 {strides = array<i32>} : memref<8x6x32xf32, #tpu.memory_space<vmem>>, vector<1x1x32xf32>,
    %c3_i32 = arith.constant 3 : i32
    %37 = arith.addi %9, %c3_i32 : i32
    %38 = arith.index_cast %37 : i32 to index
    %39 = memref.load %arg2[%38] : memref<48xi32, #tpu.memory_space<smem>>
    %40 = arith.index_cast %39 : i32 to index
    %c0_9 = arith.constant 0 : index
    %41 = vector.load %arg4[%40, %c0_9] : memref<50x32xf32, #tpu.memory_space<vmem>>, vector<1x32xf32>
    %42 = arith.index_cast %c0_i32 : i32 to index
    %c3 = arith.constant 3 : index
    %c0_10 = arith.constant 0 : index
    %43 = vector.load %arg7[%42, %c3, %c0_10] : memref<8x6x32xf32, #tpu.memory_space<vmem>>, vector<1x1x32xf32>
    %44 = vector.shape_cast %43 : vector<1x1x32xf32> to vector<1x32xf32>
    %45 = vector.shape_cast %41 : vector<1x32xf32> to vector<1x1x32xf32>
    tpu.vector_store %arg7[%42, %c3, %c0_10], %45 {strides = array<i32>} : memref<8x6x32xf32, #tpu.memory_space<vmem>>, vector<1x1x32xf32>,
    %c4_i32 = arith.constant 4 : i32
    %46 = arith.addi %9, %c4_i32 : i32
    %47 = arith.index_cast %46 : i32 to index
    %48 = memref.load %arg2[%47] : memref<48xi32, #tpu.memory_space<smem>>
    %49 = arith.index_cast %48 : i32 to index
    %c0_11 = arith.constant 0 : index
    %50 = vector.load %arg4[%49, %c0_11] : memref<50x32xf32, #tpu.memory_space<vmem>>, vector<1x32xf32>
    %51 = arith.index_cast %c0_i32 : i32 to index
    %c4 = arith.constant 4 : index
    %c0_12 = arith.constant 0 : index
    %52 = vector.load %arg7[%51, %c4, %c0_12] : memref<8x6x32xf32, #tpu.memory_space<vmem>>, vector<1x1x32xf32>
    %53 = vector.shape_cast %52 : vector<1x1x32xf32> to vector<1x32xf32>
    %54 = vector.shape_cast %50 : vector<1x32xf32> to vector<1x1x32xf32>
    tpu.vector_store %arg7[%51, %c4, %c0_12], %54 {strides = array<i32>} : memref<8x6x32xf32, #tpu.memory_space<vmem>>, vector<1x1x32xf32>,
    %c5_i32 = arith.constant 5 : i32
    %55 = arith.addi %9, %c5_i32 : i32
    %56 = arith.index_cast %55 : i32 to index
    %57 = memref.load %arg2[%56] : memref<48xi32, #tpu.memory_space<smem>>
    %58 = arith.index_cast %57 : i32 to index
    %c0_13 = arith.constant 0 : index
    %59 = vector.load %arg4[%58, %c0_13] : memref<50x32xf32, #tpu.memory_space<vmem>>, vector<1x32xf32>
    %60 = arith.index_cast %c0_i32 : i32 to index
    %c5 = arith.constant 5 : index
    %c0_14 = arith.constant 0 : index
    %61 = vector.load %arg7[%60, %c5, %c0_14] : memref<8x6x32xf32, #tpu.memory_space<vmem>>, vector<1x1x32xf32>
    %62 = vector.shape_cast %61 : vector<1x1x32xf32> to vector<1x32xf32>
    %63 = vector.shape_cast %59 : vector<1x32xf32> to vector<1x1x32xf32>
    tpu.vector_store %arg7[%60, %c5, %c0_14], %63 {strides = array<i32>} : memref<8x6x32xf32, #tpu.memory_space<vmem>>, vector<1x1x32xf32>,
    %c1_i32_15 = arith.constant 1 : i32
    %64 = arith.addi %0, %c1_i32_15 : i32
    %65 = arith.index_cast %64 : i32 to index
    %66 = memref.load %arg1[%65] : memref<8xi32, #tpu.memory_space<smem>>
    %67 = arith.index_cast %66 : i32 to index
    %c0_16 = arith.constant 0 : index
    %68 = vector.load %arg3[%67, %c0_16] : memref<50x32xf32, #tpu.memory_space<vmem>>, vector<1x32xf32>
    %69 = arith.index_cast %c1_i32_15 : i32 to index
    %c0_17 = arith.constant 0 : index
    %70 = vector.load %arg6[%69, %c0_17] : memref<8x32xf32, #tpu.memory_space<vmem>>, vector<1x32xf32>
    tpu.vector_store %arg6[%69, %c0_17], %68 {strides = array<i32>} : memref<8x32xf32, #tpu.memory_space<vmem>>, vector<1x32xf32>,
    %71 = arith.addi %0, %c1_i32_15 : i32
    %c6_i32_18 = arith.constant 6 : i32
    %72 = arith.muli %71, %c6_i32_18 : i32
    %c0_i32_19 = arith.constant 0 : i32
    %73 = arith.addi %72, %c0_i32_19 : i32
    %74 = arith.index_cast %73 : i32 to index
    %75 = memref.load %arg2[%74] : memref<48xi32, #tpu.memory_space<smem>>
    %76 = arith.index_cast %75 : i32 to index
    %c0_20 = arith.constant 0 : index
    %77 = vector.load %arg4[%76, %c0_20] : memref<50x32xf32, #tpu.memory_space<vmem>>, vector<1x32xf32>
    %78 = arith.index_cast %c1_i32_15 : i32 to index
    %c0_21 = arith.constant 0 : index
    %c0_22 = arith.constant 0 : index
    %79 = vector.load %arg7[%78, %c0_21, %c0_22] : memref<8x6x32xf32, #tpu.memory_space<vmem>>, vector<1x1x32xf32>
    %80 = vector.shape_cast %79 : vector<1x1x32xf32> to vector<1x32xf32>
    %81 = vector.shape_cast %77 : vector<1x32xf32> to vector<1x1x32xf32>
    tpu.vector_store %arg7[%78, %c0_21, %c0_22], %81 {strides = array<i32>} : memref<8x6x32xf32, #tpu.memory_space<vmem>>, vector<1x1x32xf32>,
    %c1_i32_23 = arith.constant 1 : i32
    %82 = arith.addi %72, %c1_i32_23 : i32
    %83 = arith.index_cast %82 : i32 to index
    %84 = memref.load %arg2[%83] : memref<48xi32, #tpu.memory_space<smem>>
    %85 = arith.index_cast %84 : i32 to index
    %c0_24 = arith.constant 0 : index
    %86 = vector.load %arg4[%85, %c0_24] : memref<50x32xf32, #tpu.memory_space<vmem>>, vector<1x32xf32>
    %87 = arith.index_cast %c1_i32_15 : i32 to index
    %c1_25 = arith.constant 1 : index
    %c0_26 = arith.constant 0 : index
    %88 = vector.load %arg7[%87, %c1_25, %c0_26] : memref<8x6x32xf32, #tpu.memory_space<vmem>>, vector<1x1x32xf32>
    %89 = vector.shape_cast %88 : vector<1x1x32xf32> to vector<1x32xf32>
    %90 = vector.shape_cast %86 : vector<1x32xf32> to vector<1x1x32xf32>
    tpu.vector_store %arg7[%87, %c1_25, %c0_26], %90 {strides = array<i32>} : memref<8x6x32xf32, #tpu.memory_space<vmem>>, vector<1x1x32xf32>,
    %c2_i32_27 = arith.constant 2 : i32
    %91 = arith.addi %72, %c2_i32_27 : i32
    %92 = arith.index_cast %91 : i32 to index
    %93 = memref.load %arg2[%92] : memref<48xi32, #tpu.memory_space<smem>>
    %94 = arith.index_cast %93 : i32 to index
    %c0_28 = arith.constant 0 : index
    %95 = vector.load %arg4[%94, %c0_28] : memref<50x32xf32, #tpu.memory_space<vmem>>, vector<1x32xf32>
    %96 = arith.index_cast %c1_i32_15 : i32 to index
    %c2_29 = arith.constant 2 : index
    %c0_30 = arith.constant 0 : index
    %97 = vector.load %arg7[%96, %c2_29, %c0_30] : memref<8x6x32xf32, #tpu.memory_space<vmem>>, vector<1x1x32xf32>
    %98 = vector.shape_cast %97 : vector<1x1x32xf32> to vector<1x32xf32>
    %99 = vector.shape_cast %95 : vector<1x32xf32> to vector<1x1x32xf32>
    tpu.vector_store %arg7[%96, %c2_29, %c0_30], %99 {strides = array<i32>} : memref<8x6x32xf32, #tpu.memory_space<vmem>>, vector<1x1x32xf32>,
    %c3_i32_31 = arith.constant 3 : i32
    %100 = arith.addi %72, %c3_i32_31 : i32
    %101 = arith.index_cast %100 : i32 to index
    %102 = memref.load %arg2[%101] : memref<48xi32, #tpu.memory_space<smem>>
    %103 = arith.index_cast %102 : i32 to index
    %c0_32 = arith.constant 0 : index
    %104 = vector.load %arg4[%103, %c0_32] : memref<50x32xf32, #tpu.memory_space<vmem>>, vector<1x32xf32>
    %105 = arith.index_cast %c1_i32_15 : i32 to index
    %c3_33 = arith.constant 3 : index
    %c0_34 = arith.constant 0 : index
    %106 = vector.load %arg7[%105, %c3_33, %c0_34] : memref<8x6x32xf32, #tpu.memory_space<vmem>>, vector<1x1x32xf32>
    %107 = vector.shape_cast %106 : vector<1x1x32xf32> to vector<1x32xf32>
    %108 = vector.shape_cast %104 : vector<1x32xf32> to vector<1x1x32xf32>
    tpu.vector_store %arg7[%105, %c3_33, %c0_34], %108 {strides = array<i32>} : memref<8x6x32xf32, #tpu.memory_space<vmem>>, vector<1x1x32xf32>,
    %c4_i32_35 = arith.constant 4 : i32
    %109 = arith.addi %72, %c4_i32_35 : i32
    %110 = arith.index_cast %109 : i32 to index
    %111 = memref.load %arg2[%110] : memref<48xi32, #tpu.memory_space<smem>>
    %112 = arith.index_cast %111 : i32 to index
    %c0_36 = arith.constant 0 : index
    %113 = vector.load %arg4[%112, %c0_36] : memref<50x32xf32, #tpu.memory_space<vmem>>, vector<1x32xf32>
    %114 = arith.index_cast %c1_i32_15 : i32 to index
    %c4_37 = arith.constant 4 : index
    %c0_38 = arith.constant 0 : index
    %115 = vector.load %arg7[%114, %c4_37, %c0_38] : memref<8x6x32xf32, #tpu.memory_space<vmem>>, vector<1x1x32xf32>
    %116 = vector.shape_cast %115 : vector<1x1x32xf32> to vector<1x32xf32>
    %117 = vector.shape_cast %113 : vector<1x32xf32> to vector<1x1x32xf32>
    tpu.vector_store %arg7[%114, %c4_37, %c0_38], %117 {strides = array<i32>} : memref<8x6x32xf32, #tpu.memory_space<vmem>>, vector<1x1x32xf32>,
    %c5_i32_39 = arith.constant 5 : i32
    %118 = arith.addi %72, %c5_i32_39 : i32
    %119 = arith.index_cast %118 : i32 to index
    %120 = memref.load %arg2[%119] : memref<48xi32, #tpu.memory_space<smem>>
    %121 = arith.index_cast %120 : i32 to index
    %c0_40 = arith.constant 0 : index
    %122 = vector.load %arg4[%121, %c0_40] : memref<50x32xf32, #tpu.memory_space<vmem>>, vector<1x32xf32>
    %123 = arith.index_cast %c1_i32_15 : i32 to index
    %c5_41 = arith.constant 5 : index
    %c0_42 = arith.constant 0 : index
    %124 = vector.load %arg7[%123, %c5_41, %c0_42] : memref<8x6x32xf32, #tpu.memory_space<vmem>>, vector<1x1x32xf32>
    %125 = vector.shape_cast %124 : vector<1x1x32xf32> to vector<1x32xf32>
    %126 = vector.shape_cast %122 : vector<1x32xf32> to vector<1x1x32xf32>
    tpu.vector_store %arg7[%123, %c5_41, %c0_42], %126 {strides = array<i32>} : memref<8x6x32xf32, #tpu.memory_space<vmem>>, vector<1x1x32xf32>,
    %c2_i32_43 = arith.constant 2 : i32
    %127 = arith.addi %0, %c2_i32_43 : i32
    %128 = arith.index_cast %127 : i32 to index
    %129 = memref.load %arg1[%128] : memref<8xi32, #tpu.memory_space<smem>>
    %130 = arith.index_cast %129 : i32 to index
    %c0_44 = arith.constant 0 : index
    %131 = vector.load %arg3[%130, %c0_44] : memref<50x32xf32, #tpu.memory_space<vmem>>, vector<1x32xf32>
    %132 = arith.index_cast %c2_i32_43 : i32 to index
    %c0_45 = arith.constant 0 : index
    %133 = vector.load %arg6[%132, %c0_45] : memref<8x32xf32, #tpu.memory_space<vmem>>, vector<1x32xf32>
    tpu.vector_store %arg6[%132, %c0_45], %131 {strides = array<i32>} : memref<8x32xf32, #tpu.memory_space<vmem>>, vector<1x32xf32>,
    %134 = arith.addi %0, %c2_i32_43 : i32
    %c6_i32_46 = arith.constant 6 : i32
    %135 = arith.muli %134, %c6_i32_46 : i32
    %c0_i32_47 = arith.constant 0 : i32
    %136 = arith.addi %135, %c0_i32_47 : i32
    %137 = arith.index_cast %136 : i32 to index
    %138 = memref.load %arg2[%137] : memref<48xi32, #tpu.memory_space<smem>>
    %139 = arith.index_cast %138 : i32 to index
    %c0_48 = arith.constant 0 : index
    %140 = vector.load %arg4[%139, %c0_48] : memref<50x32xf32, #tpu.memory_space<vmem>>, vector<1x32xf32>
    %141 = arith.index_cast %c2_i32_43 : i32 to index
    %c0_49 = arith.constant 0 : index
    %c0_50 = arith.constant 0 : index
    %142 = vector.load %arg7[%141, %c0_49, %c0_50] : memref<8x6x32xf32, #tpu.memory_space<vmem>>, vector<1x1x32xf32>
    %143 = vector.shape_cast %142 : vector<1x1x32xf32> to vector<1x32xf32>
    %144 = vector.shape_cast %140 : vector<1x32xf32> to vector<1x1x32xf32>
    tpu.vector_store %arg7[%141, %c0_49, %c0_50], %144 {strides = array<i32>} : memref<8x6x32xf32, #tpu.memory_space<vmem>>, vector<1x1x32xf32>,
    %c1_i32_51 = arith.constant 1 : i32
    %145 = arith.addi %135, %c1_i32_51 : i32
    %146 = arith.index_cast %145 : i32 to index
    %147 = memref.load %arg2[%146] : memref<48xi32, #tpu.memory_space<smem>>
    %148 = arith.index_cast %147 : i32 to index
    %c0_52 = arith.constant 0 : index
    %149 = vector.load %arg4[%148, %c0_52] : memref<50x32xf32, #tpu.memory_space<vmem>>, vector<1x32xf32>
    %150 = arith.index_cast %c2_i32_43 : i32 to index
    %c1_53 = arith.constant 1 : index
    %c0_54 = arith.constant 0 : index
    %151 = vector.load %arg7[%150, %c1_53, %c0_54] : memref<8x6x32xf32, #tpu.memory_space<vmem>>, vector<1x1x32xf32>
    %152 = vector.shape_cast %151 : vector<1x1x32xf32> to vector<1x32xf32>
    %153 = vector.shape_cast %149 : vector<1x32xf32> to vector<1x1x32xf32>
    tpu.vector_store %arg7[%150, %c1_53, %c0_54], %153 {strides = array<i32>} : memref<8x6x32xf32, #tpu.memory_space<vmem>>, vector<1x1x32xf32>,
    %c2_i32_55 = arith.constant 2 : i32
    %154 = arith.addi %135, %c2_i32_55 : i32
    %155 = arith.index_cast %154 : i32 to index
    %156 = memref.load %arg2[%155] : memref<48xi32, #tpu.memory_space<smem>>
    %157 = arith.index_cast %156 : i32 to index
    %c0_56 = arith.constant 0 : index
    %158 = vector.load %arg4[%157, %c0_56] : memref<50x32xf32, #tpu.memory_space<vmem>>, vector<1x32xf32>
    %159 = arith.index_cast %c2_i32_43 : i32 to index
    %c2_57 = arith.constant 2 : index
    %c0_58 = arith.constant 0 : index
    %160 = vector.load %arg7[%159, %c2_57, %c0_58] : memref<8x6x32xf32, #tpu.memory_space<vmem>>, vector<1x1x32xf32>
    %161 = vector.shape_cast %160 : vector<1x1x32xf32> to vector<1x32xf32>
    %162 = vector.shape_cast %158 : vector<1x32xf32> to vector<1x1x32xf32>
    tpu.vector_store %arg7[%159, %c2_57, %c0_58], %162 {strides = array<i32>} : memref<8x6x32xf32, #tpu.memory_space<vmem>>, vector<1x1x32xf32>,
    %c3_i32_59 = arith.constant 3 : i32
    %163 = arith.addi %135, %c3_i32_59 : i32
    %164 = arith.index_cast %163 : i32 to index
    %165 = memref.load %arg2[%164] : memref<48xi32, #tpu.memory_space<smem>>
    %166 = arith.index_cast %165 : i32 to index
    %c0_60 = arith.constant 0 : index
    %167 = vector.load %arg4[%166, %c0_60] : memref<50x32xf32, #tpu.memory_space<vmem>>, vector<1x32xf32>
    %168 = arith.index_cast %c2_i32_43 : i32 to index
    %c3_61 = arith.constant 3 : index
    %c0_62 = arith.constant 0 : index
    %169 = vector.load %arg7[%168, %c3_61, %c0_62] : memref<8x6x32xf32, #tpu.memory_space<vmem>>, vector<1x1x32xf32>
    %170 = vector.shape_cast %169 : vector<1x1x32xf32> to vector<1x32xf32>
    %171 = vector.shape_cast %167 : vector<1x32xf32> to vector<1x1x32xf32>
    tpu.vector_store %arg7[%168, %c3_61, %c0_62], %171 {strides = array<i32>} : memref<8x6x32xf32, #tpu.memory_space<vmem>>, vector<1x1x32xf32>,
    %c4_i32_63 = arith.constant 4 : i32
    %172 = arith.addi %135, %c4_i32_63 : i32
    %173 = arith.index_cast %172 : i32 to index
    %174 = memref.load %arg2[%173] : memref<48xi32, #tpu.memory_space<smem>>
    %175 = arith.index_cast %174 : i32 to index
    %c0_64 = arith.constant 0 : index
    %176 = vector.load %arg4[%175, %c0_64] : memref<50x32xf32, #tpu.memory_space<vmem>>, vector<1x32xf32>
    %177 = arith.index_cast %c2_i32_43 : i32 to index
    %c4_65 = arith.constant 4 : index
    %c0_66 = arith.constant 0 : index
    %178 = vector.load %arg7[%177, %c4_65, %c0_66] : memref<8x6x32xf32, #tpu.memory_space<vmem>>, vector<1x1x32xf32>
    %179 = vector.shape_cast %178 : vector<1x1x32xf32> to vector<1x32xf32>
    %180 = vector.shape_cast %176 : vector<1x32xf32> to vector<1x1x32xf32>
    tpu.vector_store %arg7[%177, %c4_65, %c0_66], %180 {strides = array<i32>} : memref<8x6x32xf32, #tpu.memory_space<vmem>>, vector<1x1x32xf32>,
    %c5_i32_67 = arith.constant 5 : i32
    %181 = arith.addi %135, %c5_i32_67 : i32
    %182 = arith.index_cast %181 : i32 to index
    %183 = memref.load %arg2[%182] : memref<48xi32, #tpu.memory_space<smem>>
    %184 = arith.index_cast %183 : i32 to index
    %c0_68 = arith.constant 0 : index
    %185 = vector.load %arg4[%184, %c0_68] : memref<50x32xf32, #tpu.memory_space<vmem>>, vector<1x32xf32>
    %186 = arith.index_cast %c2_i32_43 : i32 to index
    %c5_69 = arith.constant 5 : index
    %c0_70 = arith.constant 0 : index
    %187 = vector.load %arg7[%186, %c5_69, %c0_70] : memref<8x6x32xf32, #tpu.memory_space<vmem>>, vector<1x1x32xf32>
    %188 = vector.shape_cast %187 : vector<1x1x32xf32> to vector<1x32xf32>
    %189 = vector.shape_cast %185 : vector<1x32xf32> to vector<1x1x32xf32>
    tpu.vector_store %arg7[%186, %c5_69, %c0_70], %189 {strides = array<i32>} : memref<8x6x32xf32, #tpu.memory_space<vmem>>, vector<1x1x32xf32>,
    %c3_i32_71 = arith.constant 3 : i32
    %190 = arith.addi %0, %c3_i32_71 : i32
    %191 = arith.index_cast %190 : i32 to index
    %192 = memref.load %arg1[%191] : memref<8xi32, #tpu.memory_space<smem>>
    %193 = arith.index_cast %192 : i32 to index
    %c0_72 = arith.constant 0 : index
    %194 = vector.load %arg3[%193, %c0_72] : memref<50x32xf32, #tpu.memory_space<vmem>>, vector<1x32xf32>
    %195 = arith.index_cast %c3_i32_71 : i32 to index
    %c0_73 = arith.constant 0 : index
    %196 = vector.load %arg6[%195, %c0_73] : memref<8x32xf32, #tpu.memory_space<vmem>>, vector<1x32xf32>
    tpu.vector_store %arg6[%195, %c0_73], %194 {strides = array<i32>} : memref<8x32xf32, #tpu.memory_space<vmem>>, vector<1x32xf32>,
    %197 = arith.addi %0, %c3_i32_71 : i32
    %c6_i32_74 = arith.constant 6 : i32
    %198 = arith.muli %197, %c6_i32_74 : i32
    %c0_i32_75 = arith.constant 0 : i32
    %199 = arith.addi %198, %c0_i32_75 : i32
    %200 = arith.index_cast %199 : i32 to index
    %201 = memref.load %arg2[%200] : memref<48xi32, #tpu.memory_space<smem>>
    %202 = arith.index_cast %201 : i32 to index
    %c0_76 = arith.constant 0 : index
    %203 = vector.load %arg4[%202, %c0_76] : memref<50x32xf32, #tpu.memory_space<vmem>>, vector<1x32xf32>
    %204 = arith.index_cast %c3_i32_71 : i32 to index
    %c0_77 = arith.constant 0 : index
    %c0_78 = arith.constant 0 : index
    %205 = vector.load %arg7[%204, %c0_77, %c0_78] : memref<8x6x32xf32, #tpu.memory_space<vmem>>, vector<1x1x32xf32>
    %206 = vector.shape_cast %205 : vector<1x1x32xf32> to vector<1x32xf32>
    %207 = vector.shape_cast %203 : vector<1x32xf32> to vector<1x1x32xf32>
    tpu.vector_store %arg7[%204, %c0_77, %c0_78], %207 {strides = array<i32>} : memref<8x6x32xf32, #tpu.memory_space<vmem>>, vector<1x1x32xf32>,
    %c1_i32_79 = arith.constant 1 : i32
    %208 = arith.addi %198, %c1_i32_79 : i32
    %209 = arith.index_cast %208 : i32 to index
    %210 = memref.load %arg2[%209] : memref<48xi32, #tpu.memory_space<smem>>
    %211 = arith.index_cast %210 : i32 to index
    %c0_80 = arith.constant 0 : index
    %212 = vector.load %arg4[%211, %c0_80] : memref<50x32xf32, #tpu.memory_space<vmem>>, vector<1x32xf32>
    %213 = arith.index_cast %c3_i32_71 : i32 to index
    %c1_81 = arith.constant 1 : index
    %c0_82 = arith.constant 0 : index
    %214 = vector.load %arg7[%213, %c1_81, %c0_82] : memref<8x6x32xf32, #tpu.memory_space<vmem>>, vector<1x1x32xf32>
    %215 = vector.shape_cast %214 : vector<1x1x32xf32> to vector<1x32xf32>
    %216 = vector.shape_cast %212 : vector<1x32xf32> to vector<1x1x32xf32>
    tpu.vector_store %arg7[%213, %c1_81, %c0_82], %216 {strides = array<i32>} : memref<8x6x32xf32, #tpu.memory_space<vmem>>, vector<1x1x32xf32>,
    %c2_i32_83 = arith.constant 2 : i32
    %217 = arith.addi %198, %c2_i32_83 : i32
    %218 = arith.index_cast %217 : i32 to index
    %219 = memref.load %arg2[%218] : memref<48xi32, #tpu.memory_space<smem>>
    %220 = arith.index_cast %219 : i32 to index
    %c0_84 = arith.constant 0 : index
    %221 = vector.load %arg4[%220, %c0_84] : memref<50x32xf32, #tpu.memory_space<vmem>>, vector<1x32xf32>
    %222 = arith.index_cast %c3_i32_71 : i32 to index
    %c2_85 = arith.constant 2 : index
    %c0_86 = arith.constant 0 : index
    %223 = vector.load %arg7[%222, %c2_85, %c0_86] : memref<8x6x32xf32, #tpu.memory_space<vmem>>, vector<1x1x32xf32>
    %224 = vector.shape_cast %223 : vector<1x1x32xf32> to vector<1x32xf32>
    %225 = vector.shape_cast %221 : vector<1x32xf32> to vector<1x1x32xf32>
    tpu.vector_store %arg7[%222, %c2_85, %c0_86], %225 {strides = array<i32>} : memref<8x6x32xf32, #tpu.memory_space<vmem>>, vector<1x1x32xf32>,
    %c3_i32_87 = arith.constant 3 : i32
    %226 = arith.addi %198, %c3_i32_87 : i32
    %227 = arith.index_cast %226 : i32 to index
    %228 = memref.load %arg2[%227] : memref<48xi32, #tpu.memory_space<smem>>
    %229 = arith.index_cast %228 : i32 to index
    %c0_88 = arith.constant 0 : index
    %230 = vector.load %arg4[%229, %c0_88] : memref<50x32xf32, #tpu.memory_space<vmem>>, vector<1x32xf32>
    %231 = arith.index_cast %c3_i32_71 : i32 to index
    %c3_89 = arith.constant 3 : index
    %c0_90 = arith.constant 0 : index
    %232 = vector.load %arg7[%231, %c3_89, %c0_90] : memref<8x6x32xf32, #tpu.memory_space<vmem>>, vector<1x1x32xf32>
    %233 = vector.shape_cast %232 : vector<1x1x32xf32> to vector<1x32xf32>
    %234 = vector.shape_cast %230 : vector<1x32xf32> to vector<1x1x32xf32>
    tpu.vector_store %arg7[%231, %c3_89, %c0_90], %234 {strides = array<i32>} : memref<8x6x32xf32, #tpu.memory_space<vmem>>, vector<1x1x32xf32>,
    %c4_i32_91 = arith.constant 4 : i32
    %235 = arith.addi %198, %c4_i32_91 : i32
    %236 = arith.index_cast %235 : i32 to index
    %237 = memref.load %arg2[%236] : memref<48xi32, #tpu.memory_space<smem>>
    %238 = arith.index_cast %237 : i32 to index
    %c0_92 = arith.constant 0 : index
    %239 = vector.load %arg4[%238, %c0_92] : memref<50x32xf32, #tpu.memory_space<vmem>>, vector<1x32xf32>
    %240 = arith.index_cast %c3_i32_71 : i32 to index
    %c4_93 = arith.constant 4 : index
    %c0_94 = arith.constant 0 : index
    %241 = vector.load %arg7[%240, %c4_93, %c0_94] : memref<8x6x32xf32, #tpu.memory_space<vmem>>, vector<1x1x32xf32>
    %242 = vector.shape_cast %241 : vector<1x1x32xf32> to vector<1x32xf32>
    %243 = vector.shape_cast %239 : vector<1x32xf32> to vector<1x1x32xf32>
    tpu.vector_store %arg7[%240, %c4_93, %c0_94], %243 {strides = array<i32>} : memref<8x6x32xf32, #tpu.memory_space<vmem>>, vector<1x1x32xf32>,
    %c5_i32_95 = arith.constant 5 : i32
    %244 = arith.addi %198, %c5_i32_95 : i32
    %245 = arith.index_cast %244 : i32 to index
    %246 = memref.load %arg2[%245] : memref<48xi32, #tpu.memory_space<smem>>
    %247 = arith.index_cast %246 : i32 to index
    %c0_96 = arith.constant 0 : index
    %248 = vector.load %arg4[%247, %c0_96] : memref<50x32xf32, #tpu.memory_space<vmem>>, vector<1x32xf32>
    %249 = arith.index_cast %c3_i32_71 : i32 to index
    %c5_97 = arith.constant 5 : index
    %c0_98 = arith.constant 0 : index
    %250 = vector.load %arg7[%249, %c5_97, %c0_98] : memref<8x6x32xf32, #tpu.memory_space<vmem>>, vector<1x1x32xf32>
    %251 = vector.shape_cast %250 : vector<1x1x32xf32> to vector<1x32xf32>
    %252 = vector.shape_cast %248 : vector<1x32xf32> to vector<1x1x32xf32>
    tpu.vector_store %arg7[%249, %c5_97, %c0_98], %252 {strides = array<i32>} : memref<8x6x32xf32, #tpu.memory_space<vmem>>, vector<1x1x32xf32>,
    %c4_i32_99 = arith.constant 4 : i32
    %253 = arith.addi %0, %c4_i32_99 : i32
    %254 = arith.index_cast %253 : i32 to index
    %255 = memref.load %arg1[%254] : memref<8xi32, #tpu.memory_space<smem>>
    %256 = arith.index_cast %255 : i32 to index
    %c0_100 = arith.constant 0 : index
    %257 = vector.load %arg3[%256, %c0_100] : memref<50x32xf32, #tpu.memory_space<vmem>>, vector<1x32xf32>
    %258 = arith.index_cast %c4_i32_99 : i32 to index
    %c0_101 = arith.constant 0 : index
    %259 = vector.load %arg6[%258, %c0_101] : memref<8x32xf32, #tpu.memory_space<vmem>>, vector<1x32xf32>
    tpu.vector_store %arg6[%258, %c0_101], %257 {strides = array<i32>} : memref<8x32xf32, #tpu.memory_space<vmem>>, vector<1x32xf32>,
    %260 = arith.addi %0, %c4_i32_99 : i32
    %c6_i32_102 = arith.constant 6 : i32
    %261 = arith.muli %260, %c6_i32_102 : i32
    %c0_i32_103 = arith.constant 0 : i32
    %262 = arith.addi %261, %c0_i32_103 : i32
    %263 = arith.index_cast %262 : i32 to index
    %264 = memref.load %arg2[%263] : memref<48xi32, #tpu.memory_space<smem>>
    %265 = arith.index_cast %264 : i32 to index
    %c0_104 = arith.constant 0 : index
    %266 = vector.load %arg4[%265, %c0_104] : memref<50x32xf32, #tpu.memory_space<vmem>>, vector<1x32xf32>
    %267 = arith.index_cast %c4_i32_99 : i32 to index
    %c0_105 = arith.constant 0 : index
    %c0_106 = arith.constant 0 : index
    %268 = vector.load %arg7[%267, %c0_105, %c0_106] : memref<8x6x32xf32, #tpu.memory_space<vmem>>, vector<1x1x32xf32>
    %269 = vector.shape_cast %268 : vector<1x1x32xf32> to vector<1x32xf32>
    %270 = vector.shape_cast %266 : vector<1x32xf32> to vector<1x1x32xf32>
    tpu.vector_store %arg7[%267, %c0_105, %c0_106], %270 {strides = array<i32>} : memref<8x6x32xf32, #tpu.memory_space<vmem>>, vector<1x1x32xf32>,
    %c1_i32_107 = arith.constant 1 : i32
    %271 = arith.addi %261, %c1_i32_107 : i32
    %272 = arith.index_cast %271 : i32 to index
    %273 = memref.load %arg2[%272] : memref<48xi32, #tpu.memory_space<smem>>
    %274 = arith.index_cast %273 : i32 to index
    %c0_108 = arith.constant 0 : index
    %275 = vector.load %arg4[%274, %c0_108] : memref<50x32xf32, #tpu.memory_space<vmem>>, vector<1x32xf32>
    %276 = arith.index_cast %c4_i32_99 : i32 to index
    %c1_109 = arith.constant 1 : index
    %c0_110 = arith.constant 0 : index
    %277 = vector.load %arg7[%276, %c1_109, %c0_110] : memref<8x6x32xf32, #tpu.memory_space<vmem>>, vector<1x1x32xf32>
    %278 = vector.shape_cast %277 : vector<1x1x32xf32> to vector<1x32xf32>
    %279 = vector.shape_cast %275 : vector<1x32xf32> to vector<1x1x32xf32>
    tpu.vector_store %arg7[%276, %c1_109, %c0_110], %279 {strides = array<i32>} : memref<8x6x32xf32, #tpu.memory_space<vmem>>, vector<1x1x32xf32>,
    %c2_i32_111 = arith.constant 2 : i32
    %280 = arith.addi %261, %c2_i32_111 : i32
    %281 = arith.index_cast %280 : i32 to index
    %282 = memref.load %arg2[%281] : memref<48xi32, #tpu.memory_space<smem>>
    %283 = arith.index_cast %282 : i32 to index
    %c0_112 = arith.constant 0 : index
    %284 = vector.load %arg4[%283, %c0_112] : memref<50x32xf32, #tpu.memory_space<vmem>>, vector<1x32xf32>
    %285 = arith.index_cast %c4_i32_99 : i32 to index
    %c2_113 = arith.constant 2 : index
    %c0_114 = arith.constant 0 : index
    %286 = vector.load %arg7[%285, %c2_113, %c0_114] : memref<8x6x32xf32, #tpu.memory_space<vmem>>, vector<1x1x32xf32>
    %287 = vector.shape_cast %286 : vector<1x1x32xf32> to vector<1x32xf32>
    %288 = vector.shape_cast %284 : vector<1x32xf32> to vector<1x1x32xf32>
    tpu.vector_store %arg7[%285, %c2_113, %c0_114], %288 {strides = array<i32>} : memref<8x6x32xf32, #tpu.memory_space<vmem>>, vector<1x1x32xf32>,
    %c3_i32_115 = arith.constant 3 : i32
    %289 = arith.addi %261, %c3_i32_115 : i32
    %290 = arith.index_cast %289 : i32 to index
    %291 = memref.load %arg2[%290] : memref<48xi32, #tpu.memory_space<smem>>
    %292 = arith.index_cast %291 : i32 to index
    %c0_116 = arith.constant 0 : index
    %293 = vector.load %arg4[%292, %c0_116] : memref<50x32xf32, #tpu.memory_space<vmem>>, vector<1x32xf32>
    %294 = arith.index_cast %c4_i32_99 : i32 to index
    %c3_117 = arith.constant 3 : index
    %c0_118 = arith.constant 0 : index
    %295 = vector.load %arg7[%294, %c3_117, %c0_118] : memref<8x6x32xf32, #tpu.memory_space<vmem>>, vector<1x1x32xf32>
    %296 = vector.shape_cast %295 : vector<1x1x32xf32> to vector<1x32xf32>
    %297 = vector.shape_cast %293 : vector<1x32xf32> to vector<1x1x32xf32>
    tpu.vector_store %arg7[%294, %c3_117, %c0_118], %297 {strides = array<i32>} : memref<8x6x32xf32, #tpu.memory_space<vmem>>, vector<1x1x32xf32>,
    %c4_i32_119 = arith.constant 4 : i32
    %298 = arith.addi %261, %c4_i32_119 : i32
    %299 = arith.index_cast %298 : i32 to index
    %300 = memref.load %arg2[%299] : memref<48xi32, #tpu.memory_space<smem>>
    %301 = arith.index_cast %300 : i32 to index
    %c0_120 = arith.constant 0 : index
    %302 = vector.load %arg4[%301, %c0_120] : memref<50x32xf32, #tpu.memory_space<vmem>>, vector<1x32xf32>
    %303 = arith.index_cast %c4_i32_99 : i32 to index
    %c4_121 = arith.constant 4 : index
    %c0_122 = arith.constant 0 : index
    %304 = vector.load %arg7[%303, %c4_121, %c0_122] : memref<8x6x32xf32, #tpu.memory_space<vmem>>, vector<1x1x32xf32>
    %305 = vector.shape_cast %304 : vector<1x1x32xf32> to vector<1x32xf32>
    %306 = vector.shape_cast %302 : vector<1x32xf32> to vector<1x1x32xf32>
    tpu.vector_store %arg7[%303, %c4_121, %c0_122], %306 {strides = array<i32>} : memref<8x6x32xf32, #tpu.memory_space<vmem>>, vector<1x1x32xf32>,
    %c5_i32_123 = arith.constant 5 : i32
    %307 = arith.addi %261, %c5_i32_123 : i32
    %308 = arith.index_cast %307 : i32 to index
    %309 = memref.load %arg2[%308] : memref<48xi32, #tpu.memory_space<smem>>
    %310 = arith.index_cast %309 : i32 to index
    %c0_124 = arith.constant 0 : index
    %311 = vector.load %arg4[%310, %c0_124] : memref<50x32xf32, #tpu.memory_space<vmem>>, vector<1x32xf32>
    %312 = arith.index_cast %c4_i32_99 : i32 to index
    %c5_125 = arith.constant 5 : index
    %c0_126 = arith.constant 0 : index
    %313 = vector.load %arg7[%312, %c5_125, %c0_126] : memref<8x6x32xf32, #tpu.memory_space<vmem>>, vector<1x1x32xf32>
    %314 = vector.shape_cast %313 : vector<1x1x32xf32> to vector<1x32xf32>
    %315 = vector.shape_cast %311 : vector<1x32xf32> to vector<1x1x32xf32>
    tpu.vector_store %arg7[%312, %c5_125, %c0_126], %315 {strides = array<i32>} : memref<8x6x32xf32, #tpu.memory_space<vmem>>, vector<1x1x32xf32>,
    %c5_i32_127 = arith.constant 5 : i32
    %316 = arith.addi %0, %c5_i32_127 : i32
    %317 = arith.index_cast %316 : i32 to index
    %318 = memref.load %arg1[%317] : memref<8xi32, #tpu.memory_space<smem>>
    %319 = arith.index_cast %318 : i32 to index
    %c0_128 = arith.constant 0 : index
    %320 = vector.load %arg3[%319, %c0_128] : memref<50x32xf32, #tpu.memory_space<vmem>>, vector<1x32xf32>
    %321 = arith.index_cast %c5_i32_127 : i32 to index
    %c0_129 = arith.constant 0 : index
    %322 = vector.load %arg6[%321, %c0_129] : memref<8x32xf32, #tpu.memory_space<vmem>>, vector<1x32xf32>
    tpu.vector_store %arg6[%321, %c0_129], %320 {strides = array<i32>} : memref<8x32xf32, #tpu.memory_space<vmem>>, vector<1x32xf32>,
    %323 = arith.addi %0, %c5_i32_127 : i32
    %c6_i32_130 = arith.constant 6 : i32
    %324 = arith.muli %323, %c6_i32_130 : i32
    %c0_i32_131 = arith.constant 0 : i32
    %325 = arith.addi %324, %c0_i32_131 : i32
    %326 = arith.index_cast %325 : i32 to index
    %327 = memref.load %arg2[%326] : memref<48xi32, #tpu.memory_space<smem>>
    %328 = arith.index_cast %327 : i32 to index
    %c0_132 = arith.constant 0 : index
    %329 = vector.load %arg4[%328, %c0_132] : memref<50x32xf32, #tpu.memory_space<vmem>>, vector<1x32xf32>
    %330 = arith.index_cast %c5_i32_127 : i32 to index
    %c0_133 = arith.constant 0 : index
    %c0_134 = arith.constant 0 : index
    %331 = vector.load %arg7[%330, %c0_133, %c0_134] : memref<8x6x32xf32, #tpu.memory_space<vmem>>, vector<1x1x32xf32>
    %332 = vector.shape_cast %331 : vector<1x1x32xf32> to vector<1x32xf32>
    %333 = vector.shape_cast %329 : vector<1x32xf32> to vector<1x1x32xf32>
    tpu.vector_store %arg7[%330, %c0_133, %c0_134], %333 {strides = array<i32>} : memref<8x6x32xf32, #tpu.memory_space<vmem>>, vector<1x1x32xf32>,
    %c1_i32_135 = arith.constant 1 : i32
    %334 = arith.addi %324, %c1_i32_135 : i32
    %335 = arith.index_cast %334 : i32 to index
    %336 = memref.load %arg2[%335] : memref<48xi32, #tpu.memory_space<smem>>
    %337 = arith.index_cast %336 : i32 to index
    %c0_136 = arith.constant 0 : index
    %338 = vector.load %arg4[%337, %c0_136] : memref<50x32xf32, #tpu.memory_space<vmem>>, vector<1x32xf32>
    %339 = arith.index_cast %c5_i32_127 : i32 to index
    %c1_137 = arith.constant 1 : index
    %c0_138 = arith.constant 0 : index
    %340 = vector.load %arg7[%339, %c1_137, %c0_138] : memref<8x6x32xf32, #tpu.memory_space<vmem>>, vector<1x1x32xf32>
    %341 = vector.shape_cast %340 : vector<1x1x32xf32> to vector<1x32xf32>
    %342 = vector.shape_cast %338 : vector<1x32xf32> to vector<1x1x32xf32>
    tpu.vector_store %arg7[%339, %c1_137, %c0_138], %342 {strides = array<i32>} : memref<8x6x32xf32, #tpu.memory_space<vmem>>, vector<1x1x32xf32>,
    %c2_i32_139 = arith.constant 2 : i32
    %343 = arith.addi %324, %c2_i32_139 : i32
    %344 = arith.index_cast %343 : i32 to index
    %345 = memref.load %arg2[%344] : memref<48xi32, #tpu.memory_space<smem>>
    %346 = arith.index_cast %345 : i32 to index
    %c0_140 = arith.constant 0 : index
    %347 = vector.load %arg4[%346, %c0_140] : memref<50x32xf32, #tpu.memory_space<vmem>>, vector<1x32xf32>
    %348 = arith.index_cast %c5_i32_127 : i32 to index
    %c2_141 = arith.constant 2 : index
    %c0_142 = arith.constant 0 : index
    %349 = vector.load %arg7[%348, %c2_141, %c0_142] : memref<8x6x32xf32, #tpu.memory_space<vmem>>, vector<1x1x32xf32>
    %350 = vector.shape_cast %349 : vector<1x1x32xf32> to vector<1x32xf32>
    %351 = vector.shape_cast %347 : vector<1x32xf32> to vector<1x1x32xf32>
    tpu.vector_store %arg7[%348, %c2_141, %c0_142], %351 {strides = array<i32>} : memref<8x6x32xf32, #tpu.memory_space<vmem>>, vector<1x1x32xf32>,
    %c3_i32_143 = arith.constant 3 : i32
    %352 = arith.addi %324, %c3_i32_143 : i32
    %353 = arith.index_cast %352 : i32 to index
    %354 = memref.load %arg2[%353] : memref<48xi32, #tpu.memory_space<smem>>
    %355 = arith.index_cast %354 : i32 to index
    %c0_144 = arith.constant 0 : index
    %356 = vector.load %arg4[%355, %c0_144] : memref<50x32xf32, #tpu.memory_space<vmem>>, vector<1x32xf32>
    %357 = arith.index_cast %c5_i32_127 : i32 to index
    %c3_145 = arith.constant 3 : index
    %c0_146 = arith.constant 0 : index
    %358 = vector.load %arg7[%357, %c3_145, %c0_146] : memref<8x6x32xf32, #tpu.memory_space<vmem>>, vector<1x1x32xf32>
    %359 = vector.shape_cast %358 : vector<1x1x32xf32> to vector<1x32xf32>
    %360 = vector.shape_cast %356 : vector<1x32xf32> to vector<1x1x32xf32>
    tpu.vector_store %arg7[%357, %c3_145, %c0_146], %360 {strides = array<i32>} : memref<8x6x32xf32, #tpu.memory_space<vmem>>, vector<1x1x32xf32>,
    %c4_i32_147 = arith.constant 4 : i32
    %361 = arith.addi %324, %c4_i32_147 : i32
    %362 = arith.index_cast %361 : i32 to index
    %363 = memref.load %arg2[%362] : memref<48xi32, #tpu.memory_space<smem>>
    %364 = arith.index_cast %363 : i32 to index
    %c0_148 = arith.constant 0 : index
    %365 = vector.load %arg4[%364, %c0_148] : memref<50x32xf32, #tpu.memory_space<vmem>>, vector<1x32xf32>
    %366 = arith.index_cast %c5_i32_127 : i32 to index
    %c4_149 = arith.constant 4 : index
    %c0_150 = arith.constant 0 : index
    %367 = vector.load %arg7[%366, %c4_149, %c0_150] : memref<8x6x32xf32, #tpu.memory_space<vmem>>, vector<1x1x32xf32>
    %368 = vector.shape_cast %367 : vector<1x1x32xf32> to vector<1x32xf32>
    %369 = vector.shape_cast %365 : vector<1x32xf32> to vector<1x1x32xf32>
    tpu.vector_store %arg7[%366, %c4_149, %c0_150], %369 {strides = array<i32>} : memref<8x6x32xf32, #tpu.memory_space<vmem>>, vector<1x1x32xf32>,
    %c5_i32_151 = arith.constant 5 : i32
    %370 = arith.addi %324, %c5_i32_151 : i32
    %371 = arith.index_cast %370 : i32 to index
    %372 = memref.load %arg2[%371] : memref<48xi32, #tpu.memory_space<smem>>
    %373 = arith.index_cast %372 : i32 to index
    %c0_152 = arith.constant 0 : index
    %374 = vector.load %arg4[%373, %c0_152] : memref<50x32xf32, #tpu.memory_space<vmem>>, vector<1x32xf32>
    %375 = arith.index_cast %c5_i32_127 : i32 to index
    %c5_153 = arith.constant 5 : index
    %c0_154 = arith.constant 0 : index
    %376 = vector.load %arg7[%375, %c5_153, %c0_154] : memref<8x6x32xf32, #tpu.memory_space<vmem>>, vector<1x1x32xf32>
    %377 = vector.shape_cast %376 : vector<1x1x32xf32> to vector<1x32xf32>
    %378 = vector.shape_cast %374 : vector<1x32xf32> to vector<1x1x32xf32>
    tpu.vector_store %arg7[%375, %c5_153, %c0_154], %378 {strides = array<i32>} : memref<8x6x32xf32, #tpu.memory_space<vmem>>, vector<1x1x32xf32>,
    %c6_i32_155 = arith.constant 6 : i32
    %379 = arith.addi %0, %c6_i32_155 : i32
    %380 = arith.index_cast %379 : i32 to index
    %381 = memref.load %arg1[%380] : memref<8xi32, #tpu.memory_space<smem>>
    %382 = arith.index_cast %381 : i32 to index
    %c0_156 = arith.constant 0 : index
    %383 = vector.load %arg3[%382, %c0_156] : memref<50x32xf32, #tpu.memory_space<vmem>>, vector<1x32xf32>
    %384 = arith.index_cast %c6_i32_155 : i32 to index
    %c0_157 = arith.constant 0 : index
    %385 = vector.load %arg6[%384, %c0_157] : memref<8x32xf32, #tpu.memory_space<vmem>>, vector<1x32xf32>
    tpu.vector_store %arg6[%384, %c0_157], %383 {strides = array<i32>} : memref<8x32xf32, #tpu.memory_space<vmem>>, vector<1x32xf32>,
    %386 = arith.addi %0, %c6_i32_155 : i32
    %c6_i32_158 = arith.constant 6 : i32
    %387 = arith.muli %386, %c6_i32_158 : i32
    %c0_i32_159 = arith.constant 0 : i32
    %388 = arith.addi %387, %c0_i32_159 : i32
    %389 = arith.index_cast %388 : i32 to index
    %390 = memref.load %arg2[%389] : memref<48xi32, #tpu.memory_space<smem>>
    %391 = arith.index_cast %390 : i32 to index
    %c0_160 = arith.constant 0 : index
    %392 = vector.load %arg4[%391, %c0_160] : memref<50x32xf32, #tpu.memory_space<vmem>>, vector<1x32xf32>
    %393 = arith.index_cast %c6_i32_155 : i32 to index
    %c0_161 = arith.constant 0 : index
    %c0_162 = arith.constant 0 : index
    %394 = vector.load %arg7[%393, %c0_161, %c0_162] : memref<8x6x32xf32, #tpu.memory_space<vmem>>, vector<1x1x32xf32>
    %395 = vector.shape_cast %394 : vector<1x1x32xf32> to vector<1x32xf32>
    %396 = vector.shape_cast %392 : vector<1x32xf32> to vector<1x1x32xf32>
    tpu.vector_store %arg7[%393, %c0_161, %c0_162], %396 {strides = array<i32>} : memref<8x6x32xf32, #tpu.memory_space<vmem>>, vector<1x1x32xf32>,
    %c1_i32_163 = arith.constant 1 : i32
    %397 = arith.addi %387, %c1_i32_163 : i32
    %398 = arith.index_cast %397 : i32 to index
    %399 = memref.load %arg2[%398] : memref<48xi32, #tpu.memory_space<smem>>
    %400 = arith.index_cast %399 : i32 to index
    %c0_164 = arith.constant 0 : index
    %401 = vector.load %arg4[%400, %c0_164] : memref<50x32xf32, #tpu.memory_space<vmem>>, vector<1x32xf32>
    %402 = arith.index_cast %c6_i32_155 : i32 to index
    %c1_165 = arith.constant 1 : index
    %c0_166 = arith.constant 0 : index
    %403 = vector.load %arg7[%402, %c1_165, %c0_166] : memref<8x6x32xf32, #tpu.memory_space<vmem>>, vector<1x1x32xf32>
    %404 = vector.shape_cast %403 : vector<1x1x32xf32> to vector<1x32xf32>
    %405 = vector.shape_cast %401 : vector<1x32xf32> to vector<1x1x32xf32>
    tpu.vector_store %arg7[%402, %c1_165, %c0_166], %405 {strides = array<i32>} : memref<8x6x32xf32, #tpu.memory_space<vmem>>, vector<1x1x32xf32>,
    %c2_i32_167 = arith.constant 2 : i32
    %406 = arith.addi %387, %c2_i32_167 : i32
    %407 = arith.index_cast %406 : i32 to index
    %408 = memref.load %arg2[%407] : memref<48xi32, #tpu.memory_space<smem>>
    %409 = arith.index_cast %408 : i32 to index
    %c0_168 = arith.constant 0 : index
    %410 = vector.load %arg4[%409, %c0_168] : memref<50x32xf32, #tpu.memory_space<vmem>>, vector<1x32xf32>
    %411 = arith.index_cast %c6_i32_155 : i32 to index
    %c2_169 = arith.constant 2 : index
    %c0_170 = arith.constant 0 : index
    %412 = vector.load %arg7[%411, %c2_169, %c0_170] : memref<8x6x32xf32, #tpu.memory_space<vmem>>, vector<1x1x32xf32>
    %413 = vector.shape_cast %412 : vector<1x1x32xf32> to vector<1x32xf32>
    %414 = vector.shape_cast %410 : vector<1x32xf32> to vector<1x1x32xf32>
    tpu.vector_store %arg7[%411, %c2_169, %c0_170], %414 {strides = array<i32>} : memref<8x6x32xf32, #tpu.memory_space<vmem>>, vector<1x1x32xf32>,
    %c3_i32_171 = arith.constant 3 : i32
    %415 = arith.addi %387, %c3_i32_171 : i32
    %416 = arith.index_cast %415 : i32 to index
    %417 = memref.load %arg2[%416] : memref<48xi32, #tpu.memory_space<smem>>
    %418 = arith.index_cast %417 : i32 to index
    %c0_172 = arith.constant 0 : index
    %419 = vector.load %arg4[%418, %c0_172] : memref<50x32xf32, #tpu.memory_space<vmem>>, vector<1x32xf32>
    %420 = arith.index_cast %c6_i32_155 : i32 to index
    %c3_173 = arith.constant 3 : index
    %c0_174 = arith.constant 0 : index
    %421 = vector.load %arg7[%420, %c3_173, %c0_174] : memref<8x6x32xf32, #tpu.memory_space<vmem>>, vector<1x1x32xf32>
    %422 = vector.shape_cast %421 : vector<1x1x32xf32> to vector<1x32xf32>
    %423 = vector.shape_cast %419 : vector<1x32xf32> to vector<1x1x32xf32>
    tpu.vector_store %arg7[%420, %c3_173, %c0_174], %423 {strides = array<i32>} : memref<8x6x32xf32, #tpu.memory_space<vmem>>, vector<1x1x32xf32>,
    %c4_i32_175 = arith.constant 4 : i32
    %424 = arith.addi %387, %c4_i32_175 : i32
    %425 = arith.index_cast %424 : i32 to index
    %426 = memref.load %arg2[%425] : memref<48xi32, #tpu.memory_space<smem>>
    %427 = arith.index_cast %426 : i32 to index
    %c0_176 = arith.constant 0 : index
    %428 = vector.load %arg4[%427, %c0_176] : memref<50x32xf32, #tpu.memory_space<vmem>>, vector<1x32xf32>
    %429 = arith.index_cast %c6_i32_155 : i32 to index
    %c4_177 = arith.constant 4 : index
    %c0_178 = arith.constant 0 : index
    %430 = vector.load %arg7[%429, %c4_177, %c0_178] : memref<8x6x32xf32, #tpu.memory_space<vmem>>, vector<1x1x32xf32>
    %431 = vector.shape_cast %430 : vector<1x1x32xf32> to vector<1x32xf32>
    %432 = vector.shape_cast %428 : vector<1x32xf32> to vector<1x1x32xf32>
    tpu.vector_store %arg7[%429, %c4_177, %c0_178], %432 {strides = array<i32>} : memref<8x6x32xf32, #tpu.memory_space<vmem>>, vector<1x1x32xf32>,
    %c5_i32_179 = arith.constant 5 : i32
    %433 = arith.addi %387, %c5_i32_179 : i32
    %434 = arith.index_cast %433 : i32 to index
    %435 = memref.load %arg2[%434] : memref<48xi32, #tpu.memory_space<smem>>
    %436 = arith.index_cast %435 : i32 to index
    %c0_180 = arith.constant 0 : index
    %437 = vector.load %arg4[%436, %c0_180] : memref<50x32xf32, #tpu.memory_space<vmem>>, vector<1x32xf32>
    %438 = arith.index_cast %c6_i32_155 : i32 to index
    %c5_181 = arith.constant 5 : index
    %c0_182 = arith.constant 0 : index
    %439 = vector.load %arg7[%438, %c5_181, %c0_182] : memref<8x6x32xf32, #tpu.memory_space<vmem>>, vector<1x1x32xf32>
    %440 = vector.shape_cast %439 : vector<1x1x32xf32> to vector<1x32xf32>
    %441 = vector.shape_cast %437 : vector<1x32xf32> to vector<1x1x32xf32>
    tpu.vector_store %arg7[%438, %c5_181, %c0_182], %441 {strides = array<i32>} : memref<8x6x32xf32, #tpu.memory_space<vmem>>, vector<1x1x32xf32>,
    %c7_i32 = arith.constant 7 : i32
    %442 = arith.addi %0, %c7_i32 : i32
    %443 = arith.index_cast %442 : i32 to index
    %444 = memref.load %arg1[%443] : memref<8xi32, #tpu.memory_space<smem>>
    %445 = arith.index_cast %444 : i32 to index
    %c0_183 = arith.constant 0 : index
    %446 = vector.load %arg3[%445, %c0_183] : memref<50x32xf32, #tpu.memory_space<vmem>>, vector<1x32xf32>
    %447 = arith.index_cast %c7_i32 : i32 to index
    %c0_184 = arith.constant 0 : index
    %448 = vector.load %arg6[%447, %c0_184] : memref<8x32xf32, #tpu.memory_space<vmem>>, vector<1x32xf32>
    tpu.vector_store %arg6[%447, %c0_184], %446 {strides = array<i32>} : memref<8x32xf32, #tpu.memory_space<vmem>>, vector<1x32xf32>,
    %449 = arith.addi %0, %c7_i32 : i32
    %c6_i32_185 = arith.constant 6 : i32
    %450 = arith.muli %449, %c6_i32_185 : i32
    %c0_i32_186 = arith.constant 0 : i32
    %451 = arith.addi %450, %c0_i32_186 : i32
    %452 = arith.index_cast %451 : i32 to index
    %453 = memref.load %arg2[%452] : memref<48xi32, #tpu.memory_space<smem>>
    %454 = arith.index_cast %453 : i32 to index
    %c0_187 = arith.constant 0 : index
    %455 = vector.load %arg4[%454, %c0_187] : memref<50x32xf32, #tpu.memory_space<vmem>>, vector<1x32xf32>
    %456 = arith.index_cast %c7_i32 : i32 to index
    %c0_188 = arith.constant 0 : index
    %c0_189 = arith.constant 0 : index
    %457 = vector.load %arg7[%456, %c0_188, %c0_189] : memref<8x6x32xf32, #tpu.memory_space<vmem>>, vector<1x1x32xf32>
    %458 = vector.shape_cast %457 : vector<1x1x32xf32> to vector<1x32xf32>
    %459 = vector.shape_cast %455 : vector<1x32xf32> to vector<1x1x32xf32>
    tpu.vector_store %arg7[%456, %c0_188, %c0_189], %459 {strides = array<i32>} : memref<8x6x32xf32, #tpu.memory_space<vmem>>, vector<1x1x32xf32>,
    %c1_i32_190 = arith.constant 1 : i32
    %460 = arith.addi %450, %c1_i32_190 : i32
    %461 = arith.index_cast %460 : i32 to index
    %462 = memref.load %arg2[%461] : memref<48xi32, #tpu.memory_space<smem>>
    %463 = arith.index_cast %462 : i32 to index
    %c0_191 = arith.constant 0 : index
    %464 = vector.load %arg4[%463, %c0_191] : memref<50x32xf32, #tpu.memory_space<vmem>>, vector<1x32xf32>
    %465 = arith.index_cast %c7_i32 : i32 to index
    %c1_192 = arith.constant 1 : index
    %c0_193 = arith.constant 0 : index
    %466 = vector.load %arg7[%465, %c1_192, %c0_193] : memref<8x6x32xf32, #tpu.memory_space<vmem>>, vector<1x1x32xf32>
    %467 = vector.shape_cast %466 : vector<1x1x32xf32> to vector<1x32xf32>
    %468 = vector.shape_cast %464 : vector<1x32xf32> to vector<1x1x32xf32>
    tpu.vector_store %arg7[%465, %c1_192, %c0_193], %468 {strides = array<i32>} : memref<8x6x32xf32, #tpu.memory_space<vmem>>, vector<1x1x32xf32>,
    %c2_i32_194 = arith.constant 2 : i32
    %469 = arith.addi %450, %c2_i32_194 : i32
    %470 = arith.index_cast %469 : i32 to index
    %471 = memref.load %arg2[%470] : memref<48xi32, #tpu.memory_space<smem>>
    %472 = arith.index_cast %471 : i32 to index
    %c0_195 = arith.constant 0 : index
    %473 = vector.load %arg4[%472, %c0_195] : memref<50x32xf32, #tpu.memory_space<vmem>>, vector<1x32xf32>
    %474 = arith.index_cast %c7_i32 : i32 to index
    %c2_196 = arith.constant 2 : index
    %c0_197 = arith.constant 0 : index
    %475 = vector.load %arg7[%474, %c2_196, %c0_197] : memref<8x6x32xf32, #tpu.memory_space<vmem>>, vector<1x1x32xf32>
    %476 = vector.shape_cast %475 : vector<1x1x32xf32> to vector<1x32xf32>
    %477 = vector.shape_cast %473 : vector<1x32xf32> to vector<1x1x32xf32>
    tpu.vector_store %arg7[%474, %c2_196, %c0_197], %477 {strides = array<i32>} : memref<8x6x32xf32, #tpu.memory_space<vmem>>, vector<1x1x32xf32>,
    %c3_i32_198 = arith.constant 3 : i32
    %478 = arith.addi %450, %c3_i32_198 : i32
    %479 = arith.index_cast %478 : i32 to index
    %480 = memref.load %arg2[%479] : memref<48xi32, #tpu.memory_space<smem>>
    %481 = arith.index_cast %480 : i32 to index
    %c0_199 = arith.constant 0 : index
    %482 = vector.load %arg4[%481, %c0_199] : memref<50x32xf32, #tpu.memory_space<vmem>>, vector<1x32xf32>
    %483 = arith.index_cast %c7_i32 : i32 to index
    %c3_200 = arith.constant 3 : index
    %c0_201 = arith.constant 0 : index
    %484 = vector.load %arg7[%483, %c3_200, %c0_201] : memref<8x6x32xf32, #tpu.memory_space<vmem>>, vector<1x1x32xf32>
    %485 = vector.shape_cast %484 : vector<1x1x32xf32> to vector<1x32xf32>
    %486 = vector.shape_cast %482 : vector<1x32xf32> to vector<1x1x32xf32>
    tpu.vector_store %arg7[%483, %c3_200, %c0_201], %486 {strides = array<i32>} : memref<8x6x32xf32, #tpu.memory_space<vmem>>, vector<1x1x32xf32>,
    %c4_i32_202 = arith.constant 4 : i32
    %487 = arith.addi %450, %c4_i32_202 : i32
    %488 = arith.index_cast %487 : i32 to index
    %489 = memref.load %arg2[%488] : memref<48xi32, #tpu.memory_space<smem>>
    %490 = arith.index_cast %489 : i32 to index
    %c0_203 = arith.constant 0 : index
    %491 = vector.load %arg4[%490, %c0_203] : memref<50x32xf32, #tpu.memory_space<vmem>>, vector<1x32xf32>
    %492 = arith.index_cast %c7_i32 : i32 to index
    %c4_204 = arith.constant 4 : index
    %c0_205 = arith.constant 0 : index
    %493 = vector.load %arg7[%492, %c4_204, %c0_205] : memref<8x6x32xf32, #tpu.memory_space<vmem>>, vector<1x1x32xf32>
    %494 = vector.shape_cast %493 : vector<1x1x32xf32> to vector<1x32xf32>
    %495 = vector.shape_cast %491 : vector<1x32xf32> to vector<1x1x32xf32>
    tpu.vector_store %arg7[%492, %c4_204, %c0_205], %495 {strides = array<i32>} : memref<8x6x32xf32, #tpu.memory_space<vmem>>, vector<1x1x32xf32>,
    %c5_i32_206 = arith.constant 5 : i32
    %496 = arith.addi %450, %c5_i32_206 : i32
    %497 = arith.index_cast %496 : i32 to index
    %498 = memref.load %arg2[%497] : memref<48xi32, #tpu.memory_space<smem>>
    %499 = arith.index_cast %498 : i32 to index
    %c0_207 = arith.constant 0 : index
    %500 = vector.load %arg4[%499, %c0_207] : memref<50x32xf32, #tpu.memory_space<vmem>>, vector<1x32xf32>
    %501 = arith.index_cast %c7_i32 : i32 to index
    %c5_208 = arith.constant 5 : index
    %c0_209 = arith.constant 0 : index
    %502 = vector.load %arg7[%501, %c5_208, %c0_209] : memref<8x6x32xf32, #tpu.memory_space<vmem>>, vector<1x1x32xf32>
    %503 = vector.shape_cast %502 : vector<1x1x32xf32> to vector<1x32xf32>
    %504 = vector.shape_cast %500 : vector<1x32xf32> to vector<1x1x32xf32>
    tpu.vector_store %arg7[%501, %c5_208, %c0_209], %504 {strides = array<i32>} : memref<8x6x32xf32, #tpu.memory_space<vmem>>, vector<1x1x32xf32>,
    %c8_i32_210 = arith.constant 8 : i32
    %c0_211 = arith.constant 0 : index
    %c0_212 = arith.constant 0 : index
    %505 = vector.load %arg6[%c0_211, %c0_212] : memref<8x32xf32, #tpu.memory_space<vmem>>, vector<8x32xf32>
    %c0_213 = arith.constant 0 : index
    %c0_214 = arith.constant 0 : index
    %c0_215 = arith.constant 0 : index
    %506 = vector.load %arg7[%c0_213, %c0_214, %c0_215] : memref<8x6x32xf32, #tpu.memory_space<vmem>>, vector<8x6x32xf32>
    %507 = vector.shape_cast %505 : vector<8x32xf32> to vector<8x1x32xf32>
    %508 = vector.broadcast %507 : vector<8x1x32xf32> to vector<8x6x32xf32>
    %509 = arith.mulf %506, %508 : vector<8x6x32xf32>
    %cst = arith.constant dense<0.000000e+00> : vector<8x6xf32>
    %510 = vector.multi_reduction <add>, %509, %cst [2] : vector<8x6x32xf32> to vector<8x6xf32>
    %cst_216 = arith.constant -1.000000e+01 : f32
    %cst_217 = arith.constant 1.000000e+01 : f32
    %511 = vector.broadcast %cst_216 : f32 to vector<8x6xf32>
    %512 = arith.maximumf %511, %510 : vector<8x6xf32>
    %513 = vector.broadcast %cst_217 : f32 to vector<8x6xf32>
    %514 = arith.minimumf %513, %512 : vector<8x6xf32>
    %515 = tpu.iota {dimensions = array<i32: 1>} : vector<8x6xi32>
    %c0_i32_218 = arith.constant 0 : i32
    %516 = vector.broadcast %c0_i32_218 : i32 to vector<8x6xi32>
    %517 = arith.cmpi eq, %515, %516 : vector<8x6xi32>
    %cst_219 = arith.constant 0.000000e+00 : f32
    %518 = vector.broadcast %cst_219 : f32 to vector<8x6xf32>
    %519 = arith.subf %518, %514 : vector<8x6xf32>
    %520 = arith.select %517, %514, %519 : vector<8x6xi1>, vector<8x6xf32>
    %cst_220 = arith.constant 0.000000e+00 : f32
    %521 = vector.broadcast %cst_220 : f32 to vector<8x6xf32>
    %522 = arith.minimumf %520, %521 : vector<8x6xf32>
    %523 = math.absf %520 : vector<8x6xf32>
    %cst_221 = arith.constant 0.000000e+00 : f32
    %524 = vector.broadcast %cst_221 : f32 to vector<8x6xf32>
    %525 = arith.subf %524, %523 : vector<8x6xf32>
    %526 = math.exp %525 : vector<8x6xf32>
    %527 = math.log1p %526 : vector<8x6xf32>
    %528 = arith.subf %522, %527 : vector<8x6xf32>
    %529 = vector.shape_cast %528 : vector<8x6xf32> to vector<1x8x6xf32>
    %cst_222 = arith.constant dense<0.000000e+00> : vector<1xf32>
    %530 = vector.multi_reduction <add>, %529, %cst_222 [1, 2] : vector<1x8x6xf32> to vector<1xf32>
    %531 = vector.shape_cast %530 : vector<1xf32> to vector<1x1x1xf32>
    %532 = vector.extract %531[0, 0, 0] : f32 from vector<1x1x1xf32>
    %cst_223 = arith.constant 0.000000e+00 : f32
    %533 = arith.subf %cst_223, %532 : f32
    %534 = vector.broadcast %533 : f32 to vector<1x8x128xf32>
    %c0_224 = arith.constant 0 : index
    %c0_225 = arith.constant 0 : index
    %c0_226 = arith.constant 0 : index
    %535 = vector.load %arg5[%c0_224, %c0_225, %c0_226] : memref<1x8x128xf32, #tpu.memory_space<vmem>>, vector<1x8x128xf32>
    tpu.vector_store %arg5[%c0_224, %c0_225, %c0_226], %534 {strides = array<i32>} : memref<1x8x128xf32, #tpu.memory_space<vmem>>, vector<1x8x128xf32>,
    return
  }
  func.func @transform_0(%arg0: i32, %arg1: memref<8xi32, #tpu.memory_space<smem>>, %arg2: memref<48xi32, #tpu.memory_space<smem>>) -> (i32, i32) {
    %c0_i32 = arith.constant 0 : i32
    %c0_i32_0 = arith.constant 0 : i32
    %c0_i32_1 = arith.constant 0 : i32
    return %c0_i32, %c0_i32_0 : i32, i32
  }
  func.func @transform_1(%arg0: i32, %arg1: memref<8xi32, #tpu.memory_space<smem>>, %arg2: memref<48xi32, #tpu.memory_space<smem>>) -> (i32, i32) {
    %c0_i32 = arith.constant 0 : i32
    %c0_i32_0 = arith.constant 0 : i32
    %c0_i32_1 = arith.constant 0 : i32
    return %c0_i32, %c0_i32_0 : i32, i32
  }
  func.func @transform_2(%arg0: i32, %arg1: memref<8xi32, #tpu.memory_space<smem>>, %arg2: memref<48xi32, #tpu.memory_space<smem>>) -> (i32, i32, i32) {
    %c0_i32 = arith.constant 0 : i32
    %c0_i32_0 = arith.constant 0 : i32
    %c0_i32_1 = arith.constant 0 : i32
    return %arg0, %c0_i32, %c0_i32_0 : i32, i32, i32
  }
}

</mosaic_0001>

<llo_original>
// kernel: skipgram_forward.1
$region0: #{skipgram_forward.1}
  #allocation0 [shape = 'u32[]', space=smem, size = 0x4, offset = 0x4, fixed_abs, tag = 'smem constant byte address 0x4 - core index']
  #allocation1 [shape = 'u32[144,128]{1,0:T(1,128)}', space=vmem, size = 0x12000, scoped, tag = 'internal scratch']
  #allocation2 [shape = 'f32[8,32]{1,0:T(8,128)}', space=vmem, size = 0x1000, scoped, tag = 'scratch operand']
  #allocation3 [shape = 'f32[8,6,32]{2,1,0:T(8,128)}', space=vmem, size = 0x8000, scoped, tag = 'scratch operand']
  #allocation4 [shape = 's32[1]{0}', space=sflag, size = 0x4, scoped, tag = 'scoped memory for skipgram_forward.1']
  #allocation5 [shape = 'u8[512]{0}', space=smem, size = 0x200, scoped, tag = 'prefetched SMEM operand 0']
  #allocation6 [shape = 'u8[512]{0}', space=smem, size = 0x200, scoped, tag = 'prefetched SMEM operand 1']
  %s0 = inlined_call_operand.vmem [shape: s32[8], index: 0, kind: input, shape index: {}]
  %s1 = inlined_call_operand.vmem [shape: s32[48], index: 1, kind: input, shape index: {}]
  %s2 = inlined_call_operand.vmem [shape: f32[50,32], index: 2, kind: input, shape index: {}]
  %s3 = inlined_call_operand.vmem [shape: f32[50,32], index: 3, kind: input, shape index: {}]
  %s4 = inlined_call_operand.vmem [shape: f32[1,8,128], index: 4, kind: output, shape index: {}]
  %s5 = sld [smem:[#allocation0]]
  $region18: #{skipgram_forward.1} parent=0
    _
  %s7 = ssub.s32 1, %s5
  %s8 = scalar_select 0, %s7, %s5
  %s9 = sshll.u32 %s0, 4
  %s10 = int_to_ptr.vmem [resolvable:$true] %s9
  %12 = dma.vmem_to_smem %s10, 16, [#allocation5], [#allocation4]
  %s13 = sshll.u32 %s1, 4
  %s14 = int_to_ptr.vmem [resolvable:$true] %s13
  %16 = dma.vmem_to_smem %s14, 16, [#allocation6], [#allocation4]
  %17 = dma.done [#allocation4], 32
  %18 = sfence
  // Predicated region
  $region2: #{skipgram_forward.1} parent=0 // pred_check
    _
  $region3: #{skipgram_forward.1} parent=0 // pred_check_branch
    %20 = sbr.rel (0) target = $region5
  $region4: #{skipgram_forward.1} parent=0 // pred_region
    _
  $region5: #{skipgram_forward.1} parent=0 // pred_fallthru
    _
  // Predicated region
  $region6: #{skipgram_forward.1} parent=0 // pred_check
    _
  $region7: #{skipgram_forward.1} parent=0 // pred_check_branch
    %22 = sbr.rel (0) target = $region9
  $region8: #{skipgram_forward.1} parent=0 // pred_region
    _
  $region9: #{skipgram_forward.1} parent=0 // pred_fallthru
    _
  %s23 = smul.u32 0, 8
  %s24 = sld [smem:[#allocation5 + %s23]]
  %s25 = scalar_lea.vmem %s2, %s24
  %v26 = vld [vmem:[%s25] sm:$0x1]
  %vm27 = vcmask 253952
  %28 = vst.msk [vmem:[#allocation2] sm:$0x1] %vm27, %v26
  %s29 = smul.u32 0, 48
  %s30 = sld [smem:[#allocation6 + %s29]]
  %s31 = scalar_lea.vmem %s3, %s30
  %v32 = vld [vmem:[%s31] sm:$0x1]
  %33 = vst.msk [vmem:[#allocation3] sm:$0x1] %vm27, %v32
  %s34 = sadd.s32 %s29, 1
  %s35 = sld [smem:[#allocation6 + %s34]]
  %s36 = scalar_lea.vmem %s3, %s35
  %v37 = vld [vmem:[%s36] sm:$0x1]
  %38 = vst.msk [vmem:[#allocation3 + $0x1] sm:$0x1] %vm27, %v37
  %s39 = sadd.s32 %s29, 2
  %s40 = sld [smem:[#allocation6 + %s39]]
  %s41 = scalar_lea.vmem %s3, %s40
  %v42 = vld [vmem:[%s41] sm:$0x1]
  %43 = vst.msk [vmem:[#allocation3 + $0x2] sm:$0x1] %vm27, %v42
  %s44 = sadd.s32 %s29, 3
  %s45 = sld [smem:[#allocation6 + %s44]]
  %s46 = scalar_lea.vmem %s3, %s45
  %v47 = vld [vmem:[%s46] sm:$0x1]
  %48 = vst.msk [vmem:[#allocation3 + $0x3] sm:$0x1] %vm27, %v47
  %s49 = sadd.s32 %s29, 4
  %s50 = sld [smem:[#allocation6 + %s49]]
  %s51 = scalar_lea.vmem %s3, %s50
  %v52 = vld [vmem:[%s51] sm:$0x1]
  %53 = vst.msk [vmem:[#allocation3 + $0x4] sm:$0x1] %vm27, %v52
  %s54 = sadd.s32 %s29, 5
  %s55 = sld [smem:[#allocation6 + %s54]]
  %s56 = scalar_lea.vmem %s3, %s55
  %v57 = vld [vmem:[%s56] sm:$0x1]
  %58 = vst.msk [vmem:[#allocation3 + $0x5] sm:$0x1] %vm27, %v57
  %s59 = sadd.s32 %s23, 1
  %s60 = sld [smem:[#allocation5 + %s59]]
  %s61 = scalar_lea.vmem %s2, %s60
  %v62 = vld [vmem:[%s61] sm:$0x1]
  %63 = vst.msk [vmem:[#allocation2 + $0x1] sm:$0x1] %vm27, %v62
  %s64 = smul.u32 %s59, 6
  %s65 = sld [smem:[#allocation6 + %s64]]
  %s66 = scalar_lea.vmem %s3, %s65
  %v67 = vld [vmem:[%s66] sm:$0x1]
  %s68 = scalar_lea.vmem [#allocation3], 8
  %69 = vst.msk [vmem:[%s68] sm:$0x1] %vm27, %v67
  %s70 = sadd.s32 %s64, 1
  %s71 = sld [smem:[#allocation6 + %s70]]
  %s72 = scalar_lea.vmem %s3, %s71
  %v73 = vld [vmem:[%s72] sm:$0x1]
  %74 = vst.msk [vmem:[%s68 + $0x1] sm:$0x1] %vm27, %v73
  %s75 = sadd.s32 %s64, 2
  %s76 = sld [smem:[#allocation6 + %s75]]
  %s77 = scalar_lea.vmem %s3, %s76
  %v78 = vld [vmem:[%s77] sm:$0x1]
  %79 = vst.msk [vmem:[%s68 + $0x2] sm:$0x1] %vm27, %v78
  %s80 = sadd.s32 %s64, 3
  %s81 = sld [smem:[#allocation6 + %s80]]
  %s82 = scalar_lea.vmem %s3, %s81
  %v83 = vld [vmem:[%s82] sm:$0x1]
  %84 = vst.msk [vmem:[%s68 + $0x3] sm:$0x1] %vm27, %v83
  %s85 = sadd.s32 %s64, 4
  %s86 = sld [smem:[#allocation6 + %s85]]
  %s87 = scalar_lea.vmem %s3, %s86
  %v88 = vld [vmem:[%s87] sm:$0x1]
  %89 = vst.msk [vmem:[%s68 + $0x4] sm:$0x1] %vm27, %v88
  %s90 = sadd.s32 %s64, 5
  %s91 = sld [smem:[#allocation6 + %s90]]
  %s92 = scalar_lea.vmem %s3, %s91
  %v93 = vld [vmem:[%s92] sm:$0x1]
  %94 = vst.msk [vmem:[%s68 + $0x5] sm:$0x1] %vm27, %v93
  %s95 = sadd.s32 %s23, 2
  %s96 = sld [smem:[#allocation5 + %s95]]
  %s97 = scalar_lea.vmem %s2, %s96
  %v98 = vld [vmem:[%s97] sm:$0x1]
  %99 = vst.msk [vmem:[#allocation2 + $0x2] sm:$0x1] %vm27, %v98
  %s100 = smul.u32 %s95, 6
  %s101 = sld [smem:[#allocation6 + %s100]]
  %s102 = scalar_lea.vmem %s3, %s101
  %v103 = vld [vmem:[%s102] sm:$0x1]
  %s104 = scalar_lea.vmem [#allocation3], 16
  %105 = vst.msk [vmem:[%s104] sm:$0x1] %vm27, %v103
  %s106 = sadd.s32 %s100, 1
  %s107 = sld [smem:[#allocation6 + %s106]]
  %s108 = scalar_lea.vmem %s3, %s107
  %v109 = vld [vmem:[%s108] sm:$0x1]
  %110 = vst.msk [vmem:[%s104 + $0x1] sm:$0x1] %vm27, %v109
  %s111 = sadd.s32 %s100, 2
  %s112 = sld [smem:[#allocation6 + %s111]]
  %s113 = scalar_lea.vmem %s3, %s112
  %v114 = vld [vmem:[%s113] sm:$0x1]
  %115 = vst.msk [vmem:[%s104 + $0x2] sm:$0x1] %vm27, %v114
  %s116 = sadd.s32 %s100, 3
  %s117 = sld [smem:[#allocation6 + %s116]]
  %s118 = scalar_lea.vmem %s3, %s117
  %v119 = vld [vmem:[%s118] sm:$0x1]
  %120 = vst.msk [vmem:[%s104 + $0x3] sm:$0x1] %vm27, %v119
  %s121 = sadd.s32 %s100, 4
  %s122 = sld [smem:[#allocation6 + %s121]]
  %s123 = scalar_lea.vmem %s3, %s122
  %v124 = vld [vmem:[%s123] sm:$0x1]
  %125 = vst.msk [vmem:[%s104 + $0x4] sm:$0x1] %vm27, %v124
  %s126 = sadd.s32 %s100, 5
  %s127 = sld [smem:[#allocation6 + %s126]]
  %s128 = scalar_lea.vmem %s3, %s127
  %v129 = vld [vmem:[%s128] sm:$0x1]
  %130 = vst.msk [vmem:[%s104 + $0x5] sm:$0x1] %vm27, %v129
  %s131 = sadd.s32 %s23, 3
  %s132 = sld [smem:[#allocation5 + %s131]]
  %s133 = scalar_lea.vmem %s2, %s132
  %v134 = vld [vmem:[%s133] sm:$0x1]
  %135 = vst.msk [vmem:[#allocation2 + $0x3] sm:$0x1] %vm27, %v134
  %s136 = smul.u32 %s131, 6
  %s137 = sld [smem:[#allocation6 + %s136]]
  %s138 = scalar_lea.vmem %s3, %s137
  %v139 = vld [vmem:[%s138] sm:$0x1]
  %s140 = scalar_lea.vmem [#allocation3], 24
  %141 = vst.msk [vmem:[%s140] sm:$0x1] %vm27, %v139
  %s142 = sadd.s32 %s136, 1
  %s143 = sld [smem:[#allocation6 + %s142]]
  %s144 = scalar_lea.vmem %s3, %s143
  %v145 = vld [vmem:[%s144] sm:$0x1]
  %146 = vst.msk [vmem:[%s140 + $0x1] sm:$0x1] %vm27, %v145
  %s147 = sadd.s32 %s136, 2
  %s148 = sld [smem:[#allocation6 + %s147]]
  %s149 = scalar_lea.vmem %s3, %s148
  %v150 = vld [vmem:[%s149] sm:$0x1]
  %151 = vst.msk [vmem:[%s140 + $0x2] sm:$0x1] %vm27, %v150
  %s152 = sadd.s32 %s136, 3
  %s153 = sld [smem:[#allocation6 + %s152]]
  %s154 = scalar_lea.vmem %s3, %s153
  %v155 = vld [vmem:[%s154] sm:$0x1]
  %156 = vst.msk [vmem:[%s140 + $0x3] sm:$0x1] %vm27, %v155
  %s157 = sadd.s32 %s136, 4
  %s158 = sld [smem:[#allocation6 + %s157]]
  %s159 = scalar_lea.vmem %s3, %s158
  %v160 = vld [vmem:[%s159] sm:$0x1]
  %161 = vst.msk [vmem:[%s140 + $0x4] sm:$0x1] %vm27, %v160
  %s162 = sadd.s32 %s136, 5
  %s163 = sld [smem:[#allocation6 + %s162]]
  %s164 = scalar_lea.vmem %s3, %s163
  %v165 = vld [vmem:[%s164] sm:$0x1]
  %166 = vst.msk [vmem:[%s140 + $0x5] sm:$0x1] %vm27, %v165
  %s167 = sadd.s32 %s23, 4
  %s168 = sld [smem:[#allocation5 + %s167]]
  %s169 = scalar_lea.vmem %s2, %s168
  %v170 = vld [vmem:[%s169] sm:$0x1]
  %171 = vst.msk [vmem:[#allocation2 + $0x4] sm:$0x1] %vm27, %v170
  %s172 = smul.u32 %s167, 6
  %s173 = sld [smem:[#allocation6 + %s172]]
  %s174 = scalar_lea.vmem %s3, %s173
  %v175 = vld [vmem:[%s174] sm:$0x1]
  %s176 = scalar_lea.vmem [#allocation3], 32
  %177 = vst.msk [vmem:[%s176] sm:$0x1] %vm27, %v175
  %s178 = sadd.s32 %s172, 1
  %s179 = sld [smem:[#allocation6 + %s178]]
  %s180 = scalar_lea.vmem %s3, %s179
  %v181 = vld [vmem:[%s180] sm:$0x1]
  %182 = vst.msk [vmem:[%s176 + $0x1] sm:$0x1] %vm27, %v181
  %s183 = sadd.s32 %s172, 2
  %s184 = sld [smem:[#allocation6 + %s183]]
  %s185 = scalar_lea.vmem %s3, %s184
  %v186 = vld [vmem:[%s185] sm:$0x1]
  %187 = vst.msk [vmem:[%s176 + $0x2] sm:$0x1] %vm27, %v186
  %s188 = sadd.s32 %s172, 3
  %s189 = sld [smem:[#allocation6 + %s188]]
  %s190 = scalar_lea.vmem %s3, %s189
  %v191 = vld [vmem:[%s190] sm:$0x1]
  %192 = vst.msk [vmem:[%s176 + $0x3] sm:$0x1] %vm27, %v191
  %s193 = sadd.s32 %s172, 4
  %s194 = sld [smem:[#allocation6 + %s193]]
  %s195 = scalar_lea.vmem %s3, %s194
  %v196 = vld [vmem:[%s195] sm:$0x1]
  %197 = vst.msk [vmem:[%s176 + $0x4] sm:$0x1] %vm27, %v196
  %s198 = sadd.s32 %s172, 5
  %s199 = sld [smem:[#allocation6 + %s198]]
  %s200 = scalar_lea.vmem %s3, %s199
  %v201 = vld [vmem:[%s200] sm:$0x1]
  %202 = vst.msk [vmem:[%s176 + $0x5] sm:$0x1] %vm27, %v201
  %s203 = sadd.s32 %s23, 5
  %s204 = sld [smem:[#allocation5 + %s203]]
  %s205 = scalar_lea.vmem %s2, %s204
  %v206 = vld [vmem:[%s205] sm:$0x1]
  %207 = vst.msk [vmem:[#allocation2 + $0x5] sm:$0x1] %vm27, %v206
  %s208 = smul.u32 %s203, 6
  %s209 = sld [smem:[#allocation6 + %s208]]
  %s210 = scalar_lea.vmem %s3, %s209
  %v211 = vld [vmem:[%s210] sm:$0x1]
  %s212 = scalar_lea.vmem [#allocation3], 40
  %213 = vst.msk [vmem:[%s212] sm:$0x1] %vm27, %v211
  %s214 = sadd.s32 %s208, 1
  %s215 = sld [smem:[#allocation6 + %s214]]
  %s216 = scalar_lea.vmem %s3, %s215
  %v217 = vld [vmem:[%s216] sm:$0x1]
  %218 = vst.msk [vmem:[%s212 + $0x1] sm:$0x1] %vm27, %v217
  %s219 = sadd.s32 %s208, 2
  %s220 = sld [smem:[#allocation6 + %s219]]
  %s221 = scalar_lea.vmem %s3, %s220
  %v222 = vld [vmem:[%s221] sm:$0x1]
  %223 = vst.msk [vmem:[%s212 + $0x2] sm:$0x1] %vm27, %v222
  %s224 = sadd.s32 %s208, 3
  %s225 = sld [smem:[#allocation6 + %s224]]
  %s226 = scalar_lea.vmem %s3, %s225
  %v227 = vld [vmem:[%s226] sm:$0x1]
  %228 = vst.msk [vmem:[%s212 + $0x3] sm:$0x1] %vm27, %v227
  %s229 = sadd.s32 %s208, 4
  %s230 = sld [smem:[#allocation6 + %s229]]
  %s231 = scalar_lea.vmem %s3, %s230
  %v232 = vld [vmem:[%s231] sm:$0x1]
  %233 = vst.msk [vmem:[%s212 + $0x4] sm:$0x1] %vm27, %v232
  %s234 = sadd.s32 %s208, 5
  %s235 = sld [smem:[#allocation6 + %s234]]
  %s236 = scalar_lea.vmem %s3, %s235
  %v237 = vld [vmem:[%s236] sm:$0x1]
  %238 = vst.msk [vmem:[%s212 + $0x5] sm:$0x1] %vm27, %v237
  %s239 = sadd.s32 %s23, 6
  %s240 = sld [smem:[#allocation5 + %s239]]
  %s241 = scalar_lea.vmem %s2, %s240
  %v242 = vld [vmem:[%s241] sm:$0x1]
  %243 = vst.msk [vmem:[#allocation2 + $0x6] sm:$0x1] %vm27, %v242
  %s244 = smul.u32 %s239, 6
  %s245 = sld [smem:[#allocation6 + %s244]]
  %s246 = scalar_lea.vmem %s3, %s245
  %v247 = vld [vmem:[%s246] sm:$0x1]
  %s248 = scalar_lea.vmem [#allocation3], 48
  %249 = vst.msk [vmem:[%s248] sm:$0x1] %vm27, %v247
  %s250 = sadd.s32 %s244, 1
  %s251 = sld [smem:[#allocation6 + %s250]]
  %s252 = scalar_lea.vmem %s3, %s251
  %v253 = vld [vmem:[%s252] sm:$0x1]
  %254 = vst.msk [vmem:[%s248 + $0x1] sm:$0x1] %vm27, %v253
  %s255 = sadd.s32 %s244, 2
  %s256 = sld [smem:[#allocation6 + %s255]]
  %s257 = scalar_lea.vmem %s3, %s256
  %v258 = vld [vmem:[%s257] sm:$0x1]
  %259 = vst.msk [vmem:[%s248 + $0x2] sm:$0x1] %vm27, %v258
  %s260 = sadd.s32 %s244, 3
  %s261 = sld [smem:[#allocation6 + %s260]]
  %s262 = scalar_lea.vmem %s3, %s261
  %v263 = vld [vmem:[%s262] sm:$0x1]
  %264 = vst.msk [vmem:[%s248 + $0x3] sm:$0x1] %vm27, %v263
  %s265 = sadd.s32 %s244, 4
  %s266 = sld [smem:[#allocation6 + %s265]]
  %s267 = scalar_lea.vmem %s3, %s266
  %v268 = vld [vmem:[%s267] sm:$0x1]
  %269 = vst.msk [vmem:[%s248 + $0x4] sm:$0x1] %vm27, %v268
  %s270 = sadd.s32 %s244, 5
  %s271 = sld [smem:[#allocation6 + %s270]]
  %s272 = scalar_lea.vmem %s3, %s271
  %v273 = vld [vmem:[%s272] sm:$0x1]
  %274 = vst.msk [vmem:[%s248 + $0x5] sm:$0x1] %vm27, %v273
  %s275 = sadd.s32 %s23, 7
  %s276 = sld [smem:[#allocation5 + %s275]]
  %s277 = scalar_lea.vmem %s2, %s276
  %v278 = vld [vmem:[%s277] sm:$0x1]
  %279 = vst.msk [vmem:[#allocation2 + $0x7] sm:$0x1] %vm27, %v278
  %s280 = smul.u32 %s275, 6
  %s281 = sld [smem:[#allocation6 + %s280]]
  %s282 = scalar_lea.vmem %s3, %s281
  %v283 = vld [vmem:[%s282] sm:$0x1]
  %s284 = scalar_lea.vmem [#allocation3], 56
  %285 = vst.msk [vmem:[%s284] sm:$0x1] %vm27, %v283
  %s286 = sadd.s32 %s280, 1
  %s287 = sld [smem:[#allocation6 + %s286]]
  %s288 = scalar_lea.vmem %s3, %s287
  %v289 = vld [vmem:[%s288] sm:$0x1]
  %290 = vst.msk [vmem:[%s284 + $0x1] sm:$0x1] %vm27, %v289
  %s291 = sadd.s32 %s280, 2
  %s292 = sld [smem:[#allocation6 + %s291]]
  %s293 = scalar_lea.vmem %s3, %s292
  %v294 = vld [vmem:[%s293] sm:$0x1]
  %295 = vst.msk [vmem:[%s284 + $0x2] sm:$0x1] %vm27, %v294
  %s296 = sadd.s32 %s280, 3
  %s297 = sld [smem:[#allocation6 + %s296]]
  %s298 = scalar_lea.vmem %s3, %s297
  %v299 = vld [vmem:[%s298] sm:$0x1]
  %300 = vst.msk [vmem:[%s284 + $0x3] sm:$0x1] %vm27, %v299
  %s301 = sadd.s32 %s280, 4
  %s302 = sld [smem:[#allocation6 + %s301]]
  %s303 = scalar_lea.vmem %s3, %s302
  %v304 = vld [vmem:[%s303] sm:$0x1]
  %305 = vst.msk [vmem:[%s284 + $0x4] sm:$0x1] %vm27, %v304
  %s306 = sadd.s32 %s280, 5
  %s307 = sld [smem:[#allocation6 + %s306]]
  %s308 = scalar_lea.vmem %s3, %s307
  %v309 = vld [vmem:[%s308] sm:$0x1]
  %310 = vst.msk [vmem:[%s284 + $0x5] sm:$0x1] %vm27, %v309
  %v311 = vld [vmem:[#allocation2] sm:$0xff]
  %v312 = vld [vmem:[#allocation3] sm:$0x3f]
  %v313 = vld [vmem:[#allocation3 + $0x8] sm:$0x3f]
  %v314 = vld [vmem:[#allocation3 + $0x10] sm:$0x3f]
  %v315 = vld [vmem:[#allocation3 + $0x18] sm:$0x3f]
  %v316 = vld [vmem:[#allocation3 + $0x20] sm:$0x3f]
  %v317 = vld [vmem:[#allocation3 + $0x28] sm:$0x3f]
  %v318 = vld [vmem:[#allocation3 + $0x30] sm:$0x3f]
  %v319 = vld [vmem:[#allocation3 + $0x38] sm:$0x3f]
  %v321 = vcombine.high %v311, %v311
  %v323 = vunpack.c.l.s4 1966171168
  %v324 = vunpack.c.0.s8 %v323
  %v325 = vlaneseq
  %v326 = vshrl.u32 %v325, 7
  %v327 = vsub.s32 %v324, %v326
  %v328 = vrot.slane %v311, %v327
  %v330 = vunpack.c.l.s4 1966171168
  %v331 = vunpack.c.0.s8 %v330
  %v332 = vlaneseq
  %v333 = vshrl.u32 %v332, 7
  %v334 = vsub.s32 %v331, %v333
  %v335 = vrot.slane %v321, %v334
  %v336 = vcombine.high %v328, %v328
  %v337 = vcombine.high %v335, %v335
  %v339 = vunpack.c.l.s4 1966171168
  %v340 = vunpack.c.0.s8 %v339
  %v341 = vlaneseq
  %v342 = vshrl.u32 %v341, 7
  %v343 = vsub.s32 %v340, %v342
  %v344 = vrot.slane %v328, %v343
  %v346 = vunpack.c.l.s4 1966171168
  %v347 = vunpack.c.0.s8 %v346
  %v348 = vlaneseq
  %v349 = vshrl.u32 %v348, 7
  %v350 = vsub.s32 %v347, %v349
  %v351 = vrot.slane %v335, %v350
  %v353 = vunpack.c.l.s4 1966171168
  %v354 = vunpack.c.0.s8 %v353
  %v355 = vlaneseq
  %v356 = vshrl.u32 %v355, 7
  %v357 = vsub.s32 %v354, %v356
  %v358 = vrot.slane %v336, %v357
  %v360 = vunpack.c.l.s4 1966171168
  %v361 = vunpack.c.0.s8 %v360
  %v362 = vlaneseq
  %v363 = vshrl.u32 %v362, 7
  %v364 = vsub.s32 %v361, %v363
  %v365 = vrot.slane %v337, %v364
  %v366 = vcombine.high %v344, %v344
  %v367 = vcombine.high %v351, %v351
  %v368 = vcombine.high %v358, %v358
  %v369 = vcombine.high %v365, %v365
  %v370 = vlaneseq
  %v371 = vshrl.u32 %v370, 7
  %v372 = vsub.s32 0, %v371
  %v373 = vrot.slane %v344, %v372
  %v374 = vlaneseq
  %v375 = vshrl.u32 %v374, 7
  %v376 = vsub.s32 0, %v375
  %v377 = vrot.slane %v358, %v376
  %v378 = vlaneseq
  %v379 = vshrl.u32 %v378, 7
  %v380 = vsub.s32 0, %v379
  %v381 = vrot.slane %v366, %v380
  %v382 = vlaneseq
  %v383 = vshrl.u32 %v382, 7
  %v384 = vsub.s32 0, %v383
  %v385 = vrot.slane %v368, %v384
  %v386 = vlaneseq
  %v387 = vshrl.u32 %v386, 7
  %v388 = vsub.s32 0, %v387
  %v389 = vrot.slane %v351, %v388
  %v390 = vlaneseq
  %v391 = vshrl.u32 %v390, 7
  %v392 = vsub.s32 0, %v391
  %v393 = vrot.slane %v365, %v392
  %v394 = vlaneseq
  %v395 = vshrl.u32 %v394, 7
  %v396 = vsub.s32 0, %v395
  %v397 = vrot.slane %v367, %v396
  %v398 = vlaneseq
  %v399 = vshrl.u32 %v398, 7
  %v400 = vsub.s32 0, %v399
  %v401 = vrot.slane %v369, %v400
  %v410 = vmul.f32 %v312, %v373
  %v411 = vmul.f32 %v313, %v377
  %v412 = vmul.f32 %v314, %v381
  %v413 = vmul.f32 %v315, %v385
  %v414 = vmul.f32 %v316, %v389
  %v415 = vmul.f32 %v317, %v393
  %v416 = vmul.f32 %v318, %v397
  %v417 = vmul.f32 %v319, %v401
  %vm418 = vcmask 259072
  %v419 = vsel %vm418, %v410, 0.0
  %420 = vadd.xlane.f32.xlu0 %v419
  %v421 = vpop.xlane.xlu0 %420
  %v422 = vsel %vm418, %v411, 0.0
  %423 = vadd.xlane.f32.xlu0 %v422
  %v424 = vpop.xlane.xlu0 %423
  %v425 = vsel %vm418, %v412, 0.0
  %426 = vadd.xlane.f32.xlu0 %v425
  %v427 = vpop.xlane.xlu0 %426
  %v428 = vsel %vm418, %v413, 0.0
  %429 = vadd.xlane.f32.xlu0 %v428
  %v430 = vpop.xlane.xlu0 %429
  %v431 = vsel %vm418, %v414, 0.0
  %432 = vadd.xlane.f32.xlu0 %v431
  %v433 = vpop.xlane.xlu0 %432
  %v434 = vsel %vm418, %v415, 0.0
  %435 = vadd.xlane.f32.xlu0 %v434
  %v436 = vpop.xlane.xlu0 %435
  %v437 = vsel %vm418, %v416, 0.0
  %438 = vadd.xlane.f32.xlu0 %v437
  %v439 = vpop.xlane.xlu0 %438
  %v440 = vsel %vm418, %v417, 0.0
  %441 = vadd.xlane.f32.xlu0 %v440
  %v442 = vpop.xlane.xlu0 %441
  %v443 = vmax.f32 %v421, -10.0
  %v444 = vmax.f32 %v424, -10.0
  %v445 = vmax.f32 %v427, -10.0
  %v446 = vmax.f32 %v430, -10.0
  %v447 = vmax.f32 %v433, -10.0
  %v448 = vmax.f32 %v436, -10.0
  %v449 = vmax.f32 %v439, -10.0
  %v450 = vmax.f32 %v442, -10.0
  %v451 = vmin.f32 %v443, 10.0
  %v452 = vmin.f32 %v444, 10.0
  %v453 = vmin.f32 %v445, 10.0
  %v454 = vmin.f32 %v446, 10.0
  %v455 = vmin.f32 %v447, 10.0
  %v456 = vmin.f32 %v448, 10.0
  %v457 = vmin.f32 %v449, 10.0
  %v458 = vmin.f32 %v450, 10.0
  %v459 = vlaneseq
  %v460 = vand.u32 %v459, 127
  %vm461 = vcmp.eq.s32.totalorder %v460, 0
  %v462 = vsub.f32 0.0, %v451
  %v463 = vsub.f32 0.0, %v452
  %v464 = vsub.f32 0.0, %v453
  %v465 = vsub.f32 0.0, %v454
  %v466 = vsub.f32 0.0, %v455
  %v467 = vsub.f32 0.0, %v456
  %v468 = vsub.f32 0.0, %v457
  %v469 = vsub.f32 0.0, %v458
  %v478 = vlaneseq
  %v479 = vshrl.u32 %v478, 7
  %v480 = vsub.s32 %v460, %v479
  %v481 = vrot.slane %v451, %v480
  %v482 = vlaneseq
  %v483 = vshrl.u32 %v482, 7
  %v484 = vsub.s32 %v460, %v483
  %v485 = vrot.slane %v452, %v484
  %v486 = vlaneseq
  %v487 = vshrl.u32 %v486, 7
  %v488 = vsub.s32 %v460, %v487
  %v489 = vrot.slane %v453, %v488
  %v490 = vlaneseq
  %v491 = vshrl.u32 %v490, 7
  %v492 = vsub.s32 %v460, %v491
  %v493 = vrot.slane %v454, %v492
  %v494 = vlaneseq
  %v495 = vshrl.u32 %v494, 7
  %v496 = vsub.s32 %v460, %v495
  %v497 = vrot.slane %v455, %v496
  %v498 = vlaneseq
  %v499 = vshrl.u32 %v498, 7
  %v500 = vsub.s32 %v460, %v499
  %v501 = vrot.slane %v456, %v500
  %v502 = vlaneseq
  %v503 = vshrl.u32 %v502, 7
  %v504 = vsub.s32 %v460, %v503
  %v505 = vrot.slane %v457, %v504
  %v506 = vlaneseq
  %v507 = vshrl.u32 %v506, 7
  %v508 = vsub.s32 %v460, %v507
  %v509 = vrot.slane %v458, %v508
  %vm510 = vcmask 1041409
  %v511 = vsel %vm510, %v485, %v481
  %vm512 = vcmask 1042434
  %v513 = vsel %vm512, %v489, %v511
  %vm514 = vcmask 1043459
  %v515 = vsel %vm514, %v493, %v513
  %vm516 = vcmask 1044484
  %v517 = vsel %vm516, %v497, %v515
  %vm518 = vcmask 1045509
  %v519 = vsel %vm518, %v501, %v517
  %vm520 = vcmask 1046534
  %v521 = vsel %vm520, %v505, %v519
  %vm522 = vcmask 1047559
  %v523 = vsel %vm522, %v509, %v521
  %v533 = vlaneseq
  %v534 = vshrl.u32 %v533, 7
  %v535 = vsub.s32 %v460, %v534
  %v536 = vrot.slane %v462, %v535
  %v537 = vlaneseq
  %v538 = vshrl.u32 %v537, 7
  %v539 = vsub.s32 %v460, %v538
  %v540 = vrot.slane %v463, %v539
  %v541 = vlaneseq
  %v542 = vshrl.u32 %v541, 7
  %v543 = vsub.s32 %v460, %v542
  %v544 = vrot.slane %v464, %v543
  %v545 = vlaneseq
  %v546 = vshrl.u32 %v545, 7
  %v547 = vsub.s32 %v460, %v546
  %v548 = vrot.slane %v465, %v547
  %v549 = vlaneseq
  %v550 = vshrl.u32 %v549, 7
  %v551 = vsub.s32 %v460, %v550
  %v552 = vrot.slane %v466, %v551
  %v553 = vlaneseq
  %v554 = vshrl.u32 %v553, 7
  %v555 = vsub.s32 %v460, %v554
  %v556 = vrot.slane %v467, %v555
  %v557 = vlaneseq
  %v558 = vshrl.u32 %v557, 7
  %v559 = vsub.s32 %v460, %v558
  %v560 = vrot.slane %v468, %v559
  %v561 = vlaneseq
  %v562 = vshrl.u32 %v561, 7
  %v563 = vsub.s32 %v460, %v562
  %v564 = vrot.slane %v469, %v563
  %v565 = vsel %vm510, %v540, %v536
  %v566 = vsel %vm512, %v544, %v565
  %v567 = vsel %vm514, %v548, %v566
  %v568 = vsel %vm516, %v552, %v567
  %v569 = vsel %vm518, %v556, %v568
  %v570 = vsel %vm520, %v560, %v569
  %v571 = vsel %vm522, %v564, %v570
  %v573 = vsel %vm461, %v523, %v571
  %v574 = vmin.f32 %v573, 0.0
  %v575 = vand.u32 2147483647, %v573
  %v576 = vsub.f32 0.0, %v575
  %v577 = vmul.f32 %v576, 1.442695
  %v578 = vpow.pop %v577
  %v579 = vadd.f32 %v578, 1.0
  %v580 = vlog2.pop %v579
  %v581 = vmul.f32 %v580, 0.6931472
  %v582 = vmul.f32 -0.5, %v578
  %v583 = vadd.f32 %v582, 1.0
  %v584 = vmul.f32 %v583, %v578
  %v585 = vand.u32 2147483647, %v578
  %vm586 = vcmp.lt.f32.partialorder %v585, 0.0004427343
  %v587 = vsel %vm586, %v584, %v581
  %v588 = vsub.f32 %v574, %v587
  %vm589 = vcmask 48128
  %v590 = vsel %vm589, %v588, 0.0
  %591 = vadd.xlane.f32.xlu0 %v590
  %v592 = vpop.xlane.xlu0 %591
  %v593 = vrot.slane %v592, 4
  %v594 = vadd.f32 %v592, %v593
  %v595 = vrot.slane %v594, 2
  %v596 = vadd.f32 %v594, %v595
  %v597 = vrot.slane %v596, 1
  %v598 = vadd.f32 %v596, %v597
  %s599 = vtos %v598
  %s600 = ssub.f32 0.0, %s599
  %v601 = vstv %s600
  %602 = vst [vmem:[%s4] sm:$0xff] %v601
  // Predicated region
  $region10: #{skipgram_forward.1} parent=0 // pred_check
    _
  $region11: #{skipgram_forward.1} parent=0 // pred_check_branch
    %604 = sbr.rel (0) target = $region13
  $region12: #{skipgram_forward.1} parent=0 // pred_region
    _
  $region13: #{skipgram_forward.1} parent=0 // pred_fallthru
    _
  // Predicated region
  $region14: #{skipgram_forward.1} parent=0 // pred_check
    _
  $region15: #{skipgram_forward.1} parent=0 // pred_check_branch
    %606 = sbr.rel (0) target = $region17
  $region16: #{skipgram_forward.1} parent=0 // pred_region
    _
  $region17: #{skipgram_forward.1} parent=0 // pred_fallthru
    _

</llo_original>
